<compile_context>
chip_gen: v6e
topology: v6e:2x2x1
jax: 0.10.0
libtpu: 0.0.40
codegen_flags: <defaults>
</compile_context>

<pallas_src>
import functools
import numpy as np

import jax
import jax.numpy as jnp
from jax.experimental import pallas as pl
from jax.experimental.pallas import tpu as pltpu


_VMEM_LIMIT = 32 * 1024 * 1024  # explicit scoped-VMEM budget on all pallas_calls


# ----------------------------------------------------------------------------
# Pallas kernels
# ----------------------------------------------------------------------------
def _mm_bias_relu_kernel(x_ref, w_ref, b_ref, o_ref, *, relu):
    """o = relu(x @ w + b); bf16 operands, f32 accumulation on the MXU."""
    acc = jnp.dot(x_ref[...], w_ref[...], preferred_element_type=jnp.float32)
    acc = acc + b_ref[...]                      # (1, N) bias broadcasts over rows
    if relu:
        acc = jnp.maximum(acc, 0.0)
    o_ref[...] = acc.astype(o_ref.dtype)


def _dueling_trunk_kernel(x_ref, w1_ref, b1_ref, w2_ref, b2_ref, y_ref):
    """Fused dueling trunk (per M tile, no cross-row coupling).

    w1 = [wa1 | wv1]            (K, 1024) : h = relu(x @ w1 + b1)
    w2 = packed, zero-padded    (1024, 128): cols 0:A  <- wa2 (rows 0:512)
                                             col  A    <- wv2 (rows 512:)
                                             cols A+1: <- 0
    y = h @ w2 + b2             (tile_m, 128)  lane-dense f32 output.
    """
    h = jnp.dot(x_ref[...], w1_ref[...], preferred_element_type=jnp.float32)
    h = jnp.maximum(h + b1_ref[...], 0.0)
    y = jnp.dot(h.astype(jnp.bfloat16), w2_ref[...],
                preferred_element_type=jnp.float32)
    y_ref[...] = (y + b2_ref[...]).astype(y_ref.dtype)


def _dueling_combine_kernel(y_ref, o_ref, *, num_actions):
    """out = val + adv - adv.mean(); the GLOBAL mean (over batch AND actions)
    couples every row, so this runs as a single tiny program over the
    (m, 128) trunk output (a few KB even at large batch)."""
    y = y_ref[...]
    adv = y[:, :num_actions]
    val = y[:, num_actions:num_actions + 1]
    o_ref[...] = (val + adv - jnp.mean(adv)).astype(o_ref.dtype)


# ----------------------------------------------------------------------------
# Tiling helper: exact-divisor, whole-unit-granularity M tiles (no padding)
# ----------------------------------------------------------------------------
def _pick_tile_m(m, unit, target):
    """Largest multiple of `unit` that divides `m` exactly, is a legal Pallas
    block extent (multiple of 8, or the full extent) and does not exceed
    max(target, unit). Falls back to the full extent (always legal)."""
    assert m % unit == 0
    n_units = m // unit
    bound = max(target, unit)
    best = m                                     # full extent: always legal
    for g in range(1, n_units + 1):
        if n_units % g:
            continue
        tm = g * unit
        if tm != m and tm % 8 != 0:
            continue
        if tm <= bound:
            best = tm                            # ascending g -> largest valid
    return best


# ----------------------------------------------------------------------------
# Pallas wrappers
# ----------------------------------------------------------------------------
def mm_bias_relu(x, w, b, *, rows_per_img, relu=True, out_dtype=jnp.bfloat16,
                 target_rows=1024):
    """Conv-as-matmul + bias + ReLU, tiled over M at whole-image granularity.
    The weight/bias blocks are grid-invariant (stay resident in VMEM); the M
    axis is grid-parallel so v7x's two TensorCores split it and the patch DMAs
    pipeline against compute. Tiles divide M exactly -> no pad/slice pass."""
    m, k = x.shape
    n = w.shape[1]
    tile_m = _pick_tile_m(m, rows_per_img, target_rows)

    return pl.pallas_call(
        functools.partial(_mm_bias_relu_kernel, relu=relu),
        out_shape=jax.ShapeDtypeStruct((m, n), out_dtype),
        grid=(m // tile_m,),
        in_specs=[
            pl.BlockSpec((tile_m, k), lambda i: (i, 0)),
            pl.BlockSpec((k, n), lambda i: (0, 0)),
            pl.BlockSpec((1, n), lambda i: (0, 0)),
        ],
        out_specs=pl.BlockSpec((tile_m, n), lambda i: (i, 0)),
        compiler_params=pltpu.CompilerParams(
            dimension_semantics=("parallel",),
            vmem_limit_bytes=_VMEM_LIMIT),
    )(x, w, b.reshape(1, n))


def dueling_head(conv_flat, w1, b1, w2, b2, num_actions, *, target_batch_tile=256):
    """M-tiled trunk (both FC matmuls, lane-dense 128-wide packed head) followed
    by a tiny single-program combine applying the global adv mean."""
    m, k = conv_flat.shape
    n1 = w1.shape[1]                 # 1024
    n2 = w2.shape[1]                 # 128 (padded, lane-dense)
    tile_bm = _pick_tile_m(m, 1, target_batch_tile)

    y = pl.pallas_call(
        _dueling_trunk_kernel,
        out_shape=jax.ShapeDtypeStruct((m, n2), jnp.float32),
        grid=(m // tile_bm,),
        in_specs=[
            pl.BlockSpec((tile_bm, k), lambda i: (i, 0)),
            pl.BlockSpec((k, n1), lambda i: (0, 0)),
            pl.BlockSpec((1, n1), lambda i: (0, 0)),
            pl.BlockSpec((n1, n2), lambda i: (0, 0)),
            pl.BlockSpec((1, n2), lambda i: (0, 0)),
        ],
        out_specs=pl.BlockSpec((tile_bm, n2), lambda i: (i, 0)),
        compiler_params=pltpu.CompilerParams(
            dimension_semantics=("parallel",),
            vmem_limit_bytes=_VMEM_LIMIT),
    )(conv_flat, w1, b1.reshape(1, n1), w2, b2.reshape(1, n2))

    return pl.pallas_call(
        functools.partial(_dueling_combine_kernel, num_actions=num_actions),
        out_shape=jax.ShapeDtypeStruct((m, num_actions), jnp.float32),
        grid=(1,),
        in_specs=[pl.BlockSpec((m, n2), lambda i: (0, 0))],
        out_specs=pl.BlockSpec((m, num_actions), lambda i: (0, 0)),
        compiler_params=pltpu.CompilerParams(vmem_limit_bytes=_VMEM_LIMIT),
    )(y)


# ----------------------------------------------------------------------------
# Glue: im2col patch extraction (pure data movement / reshape, bf16)
# ----------------------------------------------------------------------------
def im2col(x, kh, kw, stride):
    """x: (N, H, W, C) -> (N*OH*OW, KH*KW*C), patch feature order (kh, kw, c)."""
    n, h, w, c = x.shape
    oh = (h - kh) // stride + 1
    ow = (w - kw) // stride + 1
    parts = []
    for i in range(kh):
        for j in range(kw):
            parts.append(x[:, i:i + oh * stride:stride, j:j + ow * stride:stride, :])
    patches = jnp.stack(parts, axis=3)          # (N, OH, OW, KH*KW, C)
    return patches.reshape(n * oh * ow, kh * kw * c), oh, ow


# ----------------------------------------------------------------------------
# Forward pass (consumes "prepared" params: bf16, scale folded, packed head)
# ----------------------------------------------------------------------------
def dueling_dqn_forward(x_nchw, prep, *, num_actions):
    n = x_nchw.shape[0]
    # NCHW -> NHWC; uint8 values are exact in bf16; the 1/256 scale is folded
    # into the conv1 weight at prep time.
    x = jnp.transpose(x_nchw, (0, 2, 3, 1)).astype(jnp.bfloat16)

    # conv1 8x8 s4 + ReLU
    p1, oh1, ow1 = im2col(x, 8, 8, 4)
    y1 = mm_bias_relu(p1, prep["w1"], prep["b1"],
                      rows_per_img=oh1 * ow1).reshape(n, oh1, ow1, 32)

    # conv2 4x4 s2 + ReLU
    p2, oh2, ow2 = im2col(y1, 4, 4, 2)
    y2 = mm_bias_relu(p2, prep["w2"], prep["b2"],
                      rows_per_img=oh2 * ow2).reshape(n, oh2, ow2, 64)

    # conv3 3x3 s1 + ReLU
    p3, oh3, ow3 = im2col(y2, 3, 3, 1)
    y3 = mm_bias_relu(p3, prep["w3"], prep["b3"],
                      rows_per_img=oh3 * ow3).reshape(n, oh3, ow3, 64)

    # NHWC flatten (no transpose); FC weight rows were permuted at prep time
    # to match PyTorch's NCHW .view(B, -1) semantics.
    conv_flat = y3.reshape(n, -1)

    # trunk FCs (M-tiled, parallel) + dueling combine (global mean, tiny)
    return dueling_head(conv_flat, prep["w_fc1"], prep["b_fc1"],
                        prep["w_fc2"], prep["b_fc2"], num_actions)


# ----------------------------------------------------------------------------
# One-time host-side parameter repacking
# ----------------------------------------------------------------------------
def prepare_params(params, conv_out_spatial, head_width=128):
    """Fold 1/256 into w1, cast weights to bf16, permute FC rows from NCHW to
    NHWC flatten order, fuse adv|val trunk FCs and pack the two head matmuls
    into a single lane-dense (1024, 128) zero-padded weight."""
    oh, ow = conv_out_spatial
    c = 64
    prep = {
        "w1": (params["w1"].astype(jnp.float32) / 256.0).astype(jnp.bfloat16),
        "b1": params["b1"].astype(jnp.float32),
        "w2": params["w2"].astype(jnp.bfloat16),
        "b2": params["b2"].astype(jnp.float32),
        "w3": params["w3"].astype(jnp.bfloat16),
        "b3": params["b3"].astype(jnp.float32),
    }
    # NHWC-flat position (i, j, c) reads the NCHW-flat weight row c*OH*OW + i*OW + j.
    perm = jnp.transpose(jnp.arange(c * oh * ow).reshape(c, oh, ow), (1, 2, 0)).reshape(-1)
    wa1 = params["wa1"][perm, :]
    wv1 = params["wv1"][perm, :]
    prep["w_fc1"] = jnp.concatenate([wa1, wv1], axis=1).astype(jnp.bfloat16)      # (K, 1024)
    prep["b_fc1"] = jnp.concatenate([params["ba1"], params["bv1"]]).astype(jnp.float32)

    a = params["wa2"].shape[1]
    assert a + 1 <= head_width
    w2p = jnp.zeros((1024, head_width), jnp.float32)
    w2p = w2p.at[:512, :a].set(params["wa2"])
    w2p = w2p.at[512:, a].set(params["wv2"][:, 0])
    prep["w_fc2"] = w2p.astype(jnp.bfloat16)                                       # (1024, 128)
    b2p = jnp.zeros((head_width,), jnp.float32)
    b2p = b2p.at[:a].set(params["ba2"])
    b2p = b2p.at[a].set(params["bv2"][0])
    prep["b_fc2"] = b2p
    return prep


# ----------------------------------------------------------------------------
# Pure-JAX f32 reference (same math as the PyTorch module) for validation
# ----------------------------------------------------------------------------
def reference_forward(x_nchw, params):
    n = x_nchw.shape[0]
    x = jnp.transpose(x_nchw, (0, 2, 3, 1)).astype(jnp.float32) / 256.0

    def conv(xx, w, b, kh, kw, s, cout):
        p, oh, ow = im2col(xx, kh, kw, s)
        y = jnp.maximum(jnp.dot(p, w) + b, 0.0)
        return y.reshape(n, oh, ow, cout)

    y = conv(x, params["w1"], params["b1"], 8, 8, 4, 32)
    y = conv(y, params["w2"], params["b2"], 4, 4, 2, 64)
    y = conv(y, params["w3"], params["b3"], 3, 3, 1, 64)
    flat = jnp.transpose(y, (0, 3, 1, 2)).reshape(n, -1)     # NCHW flatten, as PyTorch
    h_adv = jnp.maximum(jnp.dot(flat, params["wa1"]) + params["ba1"], 0.0)
    h_val = jnp.maximum(jnp.dot(flat, params["wv1"]) + params["bv1"], 0.0)
    adv = jnp.dot(h_adv, params["wa2"]) + params["ba2"]
    val = jnp.dot(h_val, params["wv2"]) + params["bv2"]
    return val + adv - jnp.mean(adv)


# ----------------------------------------------------------------------------
# Deterministic parameter initialization (PyTorch-default-like uniform, f32)
# ----------------------------------------------------------------------------
def _uinit(key, fan_in, shape):
    bound = 1.0 / np.sqrt(fan_in)
    return jax.random.uniform(key, shape, jnp.float32, -bound, bound)


def init_params(key, input_shape, num_actions):
    c_in, h, w = input_shape
    cs = lambda s, k, st: (s - k) // st + 1
    oh = cs(cs(cs(h, 8, 4), 4, 2), 3, 1)
    ow = cs(cs(cs(w, 8, 4), 4, 2), 3, 1)
    conv_out = 64 * oh * ow

    ks = jax.random.split(key, 14)
    p = {}
    p["w1"] = _uinit(ks[0], c_in * 64, (8, 8, c_in, 32)).reshape(8 * 8 * c_in, 32)
    p["b1"] = _uinit(ks[1], c_in * 64, (32,))
    p["w2"] = _uinit(ks[2], 32 * 16, (4, 4, 32, 64)).reshape(4 * 4 * 32, 64)
    p["b2"] = _uinit(ks[3], 32 * 16, (64,))
    p["w3"] = _uinit(ks[4], 64 * 9, (3, 3, 64, 64)).reshape(3 * 3 * 64, 64)
    p["b3"] = _uinit(ks[5], 64 * 9, (64,))
    p["wa1"] = _uinit(ks[6], conv_out, (conv_out, 512))
    p["ba1"] = _uinit(ks[7], conv_out, (512,))
    p["wa2"] = _uinit(ks[8], 512, (512, num_actions))
    p["ba2"] = _uinit(ks[9], 512, (num_actions,))
    p["wv1"] = _uinit(ks[10], conv_out, (conv_out, 512))
    p["bv1"] = _uinit(ks[11], conv_out, (512,))
    p["wv2"] = _uinit(ks[12], 512, (512, 1))
    p["bv2"] = _uinit(ks[13], 512, (1,))
    return p, (oh, ow)


if __name__ == "__main__":
    # Small shapes consistent with the module: 44x44 input -> 10 -> 4 -> 2
    # spatial, conv_out_size = 64*2*2 = 256 (so the NHWC weight permutation is
    # actually exercised).
    batch, input_shape, num_actions = 2, (4, 44, 44), 6

    key = jax.random.PRNGKey(0)
    kx, kp = jax.random.split(key)
    x = jax.random.randint(kx, (batch, *input_shape), 0, 256, dtype=jnp.int32).astype(jnp.uint8)
    params, conv_hw = init_params(kp, input_shape, num_actions)
    prep = prepare_params(params, conv_hw)

    fwd = jax.jit(functools.partial(dueling_dqn_forward, num_actions=num_actions))
    out = fwd(x, prep)
    out = jax.block_until_ready(out)

    ref = reference_forward(x, params)
    # bf16 MXU operands vs. pure-f32 reference -> slightly looser tolerance.
    np.testing.assert_allclose(np.asarray(out), np.asarray(ref), rtol=2e-2, atol=2e-2)
    assert out.shape == (batch, num_actions) and out.dtype == jnp.float32
    print("KERNEL_OK")
</pallas_src>

<mosaic_0001>
module attributes {stable_mosaic.version = 11 : i64} {
  func.func @_mm_bias_relu_kernel(%arg0: i32, %arg1: memref<200x256xbf16, #tpu.memory_space<vmem>>, %arg2: memref<256x32xbf16, #tpu.memory_space<vmem>>, %arg3: memref<1x32xf32, #tpu.memory_space<vmem>>, %arg4: memref<200x32xbf16, #tpu.memory_space<vmem>>) attributes {dimension_semantics = [#tpu.dimension_semantics<parallel>], iteration_bounds = array<i64: 1>, scalar_prefetch = 0 : i64, scratch_operands = 0 : i64, tpu.core_type = #tpu.core_type<tc>, window_params = [{transform_indices = @transform_0, window_bounds = array<i64: 200, 256>}, {pipeline_mode = #tpu.pipeline_mode<synchronous>, transform_indices = @transform_1, window_bounds = array<i64: 256, 32>}, {pipeline_mode = #tpu.pipeline_mode<synchronous>, transform_indices = @transform_2, window_bounds = array<i64: 1, 32>}, {transform_indices = @transform_3, window_bounds = array<i64: 200, 32>}]} {
    %c0 = arith.constant 0 : index
    %c0_0 = arith.constant 0 : index
    %0 = vector.load %arg1[%c0, %c0_0] : memref<200x256xbf16, #tpu.memory_space<vmem>>, vector<200x256xbf16>
    %c0_1 = arith.constant 0 : index
    %c0_2 = arith.constant 0 : index
    %1 = vector.load %arg2[%c0_1, %c0_2] : memref<256x32xbf16, #tpu.memory_space<vmem>>, vector<256x32xbf16>
    %cst = arith.constant dense<0.000000e+00> : vector<200x32xf32>
    %2 = tpu.matmul %0, %1, %cst {dimension_numbers = #tpu.dot_dimension_numbers<[1], [0], [0], [1], [0, 0, 1, 1], [], []>} : vector<200x256xbf16>, vector<256x32xbf16>, vector<200x32xf32> -> vector<200x32xf32>
    %c0_3 = arith.constant 0 : index
    %c0_4 = arith.constant 0 : index
    %3 = vector.load %arg3[%c0_3, %c0_4] : memref<1x32xf32, #tpu.memory_space<vmem>>, vector<1x32xf32>
    %4 = vector.broadcast %3 : vector<1x32xf32> to vector<200x32xf32>
    %5 = arith.addf %2, %4 : vector<200x32xf32>
    %cst_5 = arith.constant 0.000000e+00 : f32
    %6 = vector.broadcast %cst_5 : f32 to vector<200x32xf32>
    %7 = arith.maximumf %5, %6 : vector<200x32xf32>
    %8 = arith.truncf %7 : vector<200x32xf32> to vector<200x32xbf16>
    %c0_6 = arith.constant 0 : index
    %c0_7 = arith.constant 0 : index
    %9 = vector.load %arg4[%c0_6, %c0_7] : memref<200x32xbf16, #tpu.memory_space<vmem>>, vector<200x32xbf16>
    tpu.vector_store %arg4[%c0_6, %c0_7], %8 {strides = array<i32>} : memref<200x32xbf16, #tpu.memory_space<vmem>>, vector<200x32xbf16>,
    return
  }
  func.func @transform_0(%arg0: i32) -> (i32, i32) {
    %c0_i32 = arith.constant 0 : i32
    %c0_i32_0 = arith.constant 0 : i32
    return %arg0, %c0_i32 : i32, i32
  }
  func.func @transform_1(%arg0: i32) -> (i32, i32) {
    %c0_i32 = arith.constant 0 : i32
    %c0_i32_0 = arith.constant 0 : i32
    %c0_i32_1 = arith.constant 0 : i32
    return %c0_i32, %c0_i32_0 : i32, i32
  }
  func.func @transform_2(%arg0: i32) -> (i32, i32) {
    %c0_i32 = arith.constant 0 : i32
    %c0_i32_0 = arith.constant 0 : i32
    %c0_i32_1 = arith.constant 0 : i32
    return %c0_i32, %c0_i32_0 : i32, i32
  }
  func.func @transform_3(%arg0: i32) -> (i32, i32) {
    %c0_i32 = arith.constant 0 : i32
    %c0_i32_0 = arith.constant 0 : i32
    return %arg0, %c0_i32 : i32, i32
  }
}

module attributes {stable_mosaic.version = 11 : i64} {
  func.func @_mm_bias_relu_kernel(%arg0: i32, %arg1: memref<32x512xbf16, #tpu.memory_space<vmem>>, %arg2: memref<512x64xbf16, #tpu.memory_space<vmem>>, %arg3: memref<1x64xf32, #tpu.memory_space<vmem>>, %arg4: memref<32x64xbf16, #tpu.memory_space<vmem>>) attributes {dimension_semantics = [#tpu.dimension_semantics<parallel>], iteration_bounds = array<i64: 1>, scalar_prefetch = 0 : i64, scratch_operands = 0 : i64, tpu.core_type = #tpu.core_type<tc>, window_params = [{transform_indices = @transform_0, window_bounds = array<i64: 32, 512>}, {pipeline_mode = #tpu.pipeline_mode<synchronous>, transform_indices = @transform_1, window_bounds = array<i64: 512, 64>}, {pipeline_mode = #tpu.pipeline_mode<synchronous>, transform_indices = @transform_2, window_bounds = array<i64: 1, 64>}, {transform_indices = @transform_3, window_bounds = array<i64: 32, 64>}]} {
    %c0 = arith.constant 0 : index
    %c0_0 = arith.constant 0 : index
    %0 = vector.load %arg1[%c0, %c0_0] : memref<32x512xbf16, #tpu.memory_space<vmem>>, vector<32x512xbf16>
    %c0_1 = arith.constant 0 : index
    %c0_2 = arith.constant 0 : index
    %1 = vector.load %arg2[%c0_1, %c0_2] : memref<512x64xbf16, #tpu.memory_space<vmem>>, vector<512x64xbf16>
    %cst = arith.constant dense<0.000000e+00> : vector<32x64xf32>
    %2 = tpu.matmul %0, %1, %cst {dimension_numbers = #tpu.dot_dimension_numbers<[1], [0], [0], [1], [0, 0, 1, 1], [], []>} : vector<32x512xbf16>, vector<512x64xbf16>, vector<32x64xf32> -> vector<32x64xf32>
    %c0_3 = arith.constant 0 : index
    %c0_4 = arith.constant 0 : index
    %3 = vector.load %arg3[%c0_3, %c0_4] : memref<1x64xf32, #tpu.memory_space<vmem>>, vector<1x64xf32>
    %4 = vector.broadcast %3 : vector<1x64xf32> to vector<32x64xf32>
    %5 = arith.addf %2, %4 : vector<32x64xf32>
    %cst_5 = arith.constant 0.000000e+00 : f32
    %6 = vector.broadcast %cst_5 : f32 to vector<32x64xf32>
    %7 = arith.maximumf %5, %6 : vector<32x64xf32>
    %8 = arith.truncf %7 : vector<32x64xf32> to vector<32x64xbf16>
    %c0_6 = arith.constant 0 : index
    %c0_7 = arith.constant 0 : index
    %9 = vector.load %arg4[%c0_6, %c0_7] : memref<32x64xbf16, #tpu.memory_space<vmem>>, vector<32x64xbf16>
    tpu.vector_store %arg4[%c0_6, %c0_7], %8 {strides = array<i32>} : memref<32x64xbf16, #tpu.memory_space<vmem>>, vector<32x64xbf16>,
    return
  }
  func.func @transform_0(%arg0: i32) -> (i32, i32) {
    %c0_i32 = arith.constant 0 : i32
    %c0_i32_0 = arith.constant 0 : i32
    return %arg0, %c0_i32 : i32, i32
  }
  func.func @transform_1(%arg0: i32) -> (i32, i32) {
    %c0_i32 = arith.constant 0 : i32
    %c0_i32_0 = arith.constant 0 : i32
    %c0_i32_1 = arith.constant 0 : i32
    return %c0_i32, %c0_i32_0 : i32, i32
  }
  func.func @transform_2(%arg0: i32) -> (i32, i32) {
    %c0_i32 = arith.constant 0 : i32
    %c0_i32_0 = arith.constant 0 : i32
    %c0_i32_1 = arith.constant 0 : i32
    return %c0_i32, %c0_i32_0 : i32, i32
  }
  func.func @transform_3(%arg0: i32) -> (i32, i32) {
    %c0_i32 = arith.constant 0 : i32
    %c0_i32_0 = arith.constant 0 : i32
    return %arg0, %c0_i32 : i32, i32
  }
}

module attributes {stable_mosaic.version = 11 : i64} {
  func.func @_dueling_trunk_kernel(%arg0: i32, %arg1: memref<2x256xbf16, #tpu.memory_space<vmem>>, %arg2: memref<256x1024xbf16, #tpu.memory_space<vmem>>, %arg3: memref<1x1024xf32, #tpu.memory_space<vmem>>, %arg4: memref<1024x128xbf16, #tpu.memory_space<vmem>>, %arg5: memref<1x128xf32, #tpu.memory_space<vmem>>, %arg6: memref<2x128xf32, #tpu.memory_space<vmem>>) attributes {dimension_semantics = [#tpu.dimension_semantics<parallel>], iteration_bounds = array<i64: 1>, scalar_prefetch = 0 : i64, scratch_operands = 0 : i64, tpu.core_type = #tpu.core_type<tc>, window_params = [{transform_indices = @transform_0, window_bounds = array<i64: 2, 256>}, {pipeline_mode = #tpu.pipeline_mode<synchronous>, transform_indices = @transform_1, window_bounds = array<i64: 256, 1024>}, {pipeline_mode = #tpu.pipeline_mode<synchronous>, transform_indices = @transform_2, window_bounds = array<i64: 1, 1024>}, {pipeline_mode = #tpu.pipeline_mode<synchronous>, transform_indices = @transform_3, window_bounds = array<i64: 1024, 128>}, {pipeline_mode = #tpu.pipeline_mode<synchronous>, transform_indices = @transform_4, window_bounds = array<i64: 1, 128>}, {transform_indices = @transform_5, window_bounds = array<i64: 2, 128>}]} {
    %c0 = arith.constant 0 : index
    %c0_0 = arith.constant 0 : index
    %0 = vector.load %arg1[%c0, %c0_0] : memref<2x256xbf16, #tpu.memory_space<vmem>>, vector<2x256xbf16>
    %c0_1 = arith.constant 0 : index
    %c0_2 = arith.constant 0 : index
    %1 = vector.load %arg2[%c0_1, %c0_2] : memref<256x1024xbf16, #tpu.memory_space<vmem>>, vector<256x1024xbf16>
    %cst = arith.constant dense<0.000000e+00> : vector<2x1024xf32>
    %2 = tpu.matmul %0, %1, %cst {dimension_numbers = #tpu.dot_dimension_numbers<[1], [0], [0], [1], [0, 0, 1, 1], [], []>} : vector<2x256xbf16>, vector<256x1024xbf16>, vector<2x1024xf32> -> vector<2x1024xf32>
    %c0_3 = arith.constant 0 : index
    %c0_4 = arith.constant 0 : index
    %3 = vector.load %arg3[%c0_3, %c0_4] : memref<1x1024xf32, #tpu.memory_space<vmem>>, vector<1x1024xf32>
    %4 = vector.broadcast %3 : vector<1x1024xf32> to vector<2x1024xf32>
    %5 = arith.addf %2, %4 : vector<2x1024xf32>
    %cst_5 = arith.constant 0.000000e+00 : f32
    %6 = vector.broadcast %cst_5 : f32 to vector<2x1024xf32>
    %7 = arith.maximumf %5, %6 : vector<2x1024xf32>
    %8 = arith.truncf %7 : vector<2x1024xf32> to vector<2x1024xbf16>
    %c0_6 = arith.constant 0 : index
    %c0_7 = arith.constant 0 : index
    %9 = vector.load %arg4[%c0_6, %c0_7] : memref<1024x128xbf16, #tpu.memory_space<vmem>>, vector<1024x128xbf16>
    %cst_8 = arith.constant dense<0.000000e+00> : vector<2x128xf32>
    %10 = tpu.matmul %8, %9, %cst_8 {dimension_numbers = #tpu.dot_dimension_numbers<[1], [0], [0], [1], [0, 0, 1, 1], [], []>} : vector<2x1024xbf16>, vector<1024x128xbf16>, vector<2x128xf32> -> vector<2x128xf32>
    %c0_9 = arith.constant 0 : index
    %c0_10 = arith.constant 0 : index
    %11 = vector.load %arg5[%c0_9, %c0_10] : memref<1x128xf32, #tpu.memory_space<vmem>>, vector<1x128xf32>
    %12 = vector.broadcast %11 : vector<1x128xf32> to vector<2x128xf32>
    %13 = arith.addf %10, %12 : vector<2x128xf32>
    %c0_11 = arith.constant 0 : index
    %c0_12 = arith.constant 0 : index
    %14 = vector.load %arg6[%c0_11, %c0_12] : memref<2x128xf32, #tpu.memory_space<vmem>>, vector<2x128xf32>
    tpu.vector_store %arg6[%c0_11, %c0_12], %13 {strides = array<i32>} : memref<2x128xf32, #tpu.memory_space<vmem>>, vector<2x128xf32>,
    return
  }
  func.func @transform_0(%arg0: i32) -> (i32, i32) {
    %c0_i32 = arith.constant 0 : i32
    %c0_i32_0 = arith.constant 0 : i32
    return %arg0, %c0_i32 : i32, i32
  }
  func.func @transform_1(%arg0: i32) -> (i32, i32) {
    %c0_i32 = arith.constant 0 : i32
    %c0_i32_0 = arith.constant 0 : i32
    %c0_i32_1 = arith.constant 0 : i32
    return %c0_i32, %c0_i32_0 : i32, i32
  }
  func.func @transform_2(%arg0: i32) -> (i32, i32) {
    %c0_i32 = arith.constant 0 : i32
    %c0_i32_0 = arith.constant 0 : i32
    %c0_i32_1 = arith.constant 0 : i32
    return %c0_i32, %c0_i32_0 : i32, i32
  }
  func.func @transform_3(%arg0: i32) -> (i32, i32) {
    %c0_i32 = arith.constant 0 : i32
    %c0_i32_0 = arith.constant 0 : i32
    %c0_i32_1 = arith.constant 0 : i32
    return %c0_i32, %c0_i32_0 : i32, i32
  }
  func.func @transform_4(%arg0: i32) -> (i32, i32) {
    %c0_i32 = arith.constant 0 : i32
    %c0_i32_0 = arith.constant 0 : i32
    %c0_i32_1 = arith.constant 0 : i32
    return %c0_i32, %c0_i32_0 : i32, i32
  }
  func.func @transform_5(%arg0: i32) -> (i32, i32) {
    %c0_i32 = arith.constant 0 : i32
    %c0_i32_0 = arith.constant 0 : i32
    return %arg0, %c0_i32 : i32, i32
  }
}

module attributes {stable_mosaic.version = 11 : i64} {
  func.func @_mm_bias_relu_kernel(%arg0: i32, %arg1: memref<8x576xbf16, #tpu.memory_space<vmem>>, %arg2: memref<576x64xbf16, #tpu.memory_space<vmem>>, %arg3: memref<1x64xf32, #tpu.memory_space<vmem>>, %arg4: memref<8x64xbf16, #tpu.memory_space<vmem>>) attributes {dimension_semantics = [#tpu.dimension_semantics<parallel>], iteration_bounds = array<i64: 1>, scalar_prefetch = 0 : i64, scratch_operands = 0 : i64, tpu.core_type = #tpu.core_type<tc>, window_params = [{transform_indices = @transform_0, window_bounds = array<i64: 8, 576>}, {pipeline_mode = #tpu.pipeline_mode<synchronous>, transform_indices = @transform_1, window_bounds = array<i64: 576, 64>}, {pipeline_mode = #tpu.pipeline_mode<synchronous>, transform_indices = @transform_2, window_bounds = array<i64: 1, 64>}, {transform_indices = @transform_3, window_bounds = array<i64: 8, 64>}]} {
    %c0 = arith.constant 0 : index
    %c0_0 = arith.constant 0 : index
    %0 = vector.load %arg1[%c0, %c0_0] : memref<8x576xbf16, #tpu.memory_space<vmem>>, vector<8x576xbf16>
    %c0_1 = arith.constant 0 : index
    %c0_2 = arith.constant 0 : index
    %1 = vector.load %arg2[%c0_1, %c0_2] : memref<576x64xbf16, #tpu.memory_space<vmem>>, vector<576x64xbf16>
    %cst = arith.constant dense<0.000000e+00> : vector<8x64xf32>
    %2 = tpu.matmul %0, %1, %cst {dimension_numbers = #tpu.dot_dimension_numbers<[1], [0], [0], [1], [0, 0, 1, 1], [], []>} : vector<8x576xbf16>, vector<576x64xbf16>, vector<8x64xf32> -> vector<8x64xf32>
    %c0_3 = arith.constant 0 : index
    %c0_4 = arith.constant 0 : index
    %3 = vector.load %arg3[%c0_3, %c0_4] : memref<1x64xf32, #tpu.memory_space<vmem>>, vector<1x64xf32>
    %4 = vector.broadcast %3 : vector<1x64xf32> to vector<8x64xf32>
    %5 = arith.addf %2, %4 : vector<8x64xf32>
    %cst_5 = arith.constant 0.000000e+00 : f32
    %6 = vector.broadcast %cst_5 : f32 to vector<8x64xf32>
    %7 = arith.maximumf %5, %6 : vector<8x64xf32>
    %8 = arith.truncf %7 : vector<8x64xf32> to vector<8x64xbf16>
    %c0_6 = arith.constant 0 : index
    %c0_7 = arith.constant 0 : index
    %9 = vector.load %arg4[%c0_6, %c0_7] : memref<8x64xbf16, #tpu.memory_space<vmem>>, vector<8x64xbf16>
    tpu.vector_store %arg4[%c0_6, %c0_7], %8 {strides = array<i32>} : memref<8x64xbf16, #tpu.memory_space<vmem>>, vector<8x64xbf16>,
    return
  }
  func.func @transform_0(%arg0: i32) -> (i32, i32) {
    %c0_i32 = arith.constant 0 : i32
    %c0_i32_0 = arith.constant 0 : i32
    return %arg0, %c0_i32 : i32, i32
  }
  func.func @transform_1(%arg0: i32) -> (i32, i32) {
    %c0_i32 = arith.constant 0 : i32
    %c0_i32_0 = arith.constant 0 : i32
    %c0_i32_1 = arith.constant 0 : i32
    return %c0_i32, %c0_i32_0 : i32, i32
  }
  func.func @transform_2(%arg0: i32) -> (i32, i32) {
    %c0_i32 = arith.constant 0 : i32
    %c0_i32_0 = arith.constant 0 : i32
    %c0_i32_1 = arith.constant 0 : i32
    return %c0_i32, %c0_i32_0 : i32, i32
  }
  func.func @transform_3(%arg0: i32) -> (i32, i32) {
    %c0_i32 = arith.constant 0 : i32
    %c0_i32_0 = arith.constant 0 : i32
    return %arg0, %c0_i32 : i32, i32
  }
}

module attributes {stable_mosaic.version = 11 : i64} {
  func.func @_dueling_combine_kernel(%arg0: i32, %arg1: memref<2x128xf32, #tpu.memory_space<vmem>>, %arg2: memref<2x6xf32, #tpu.memory_space<vmem>>) attributes {dimension_semantics = [#tpu.dimension_semantics<arbitrary>], iteration_bounds = array<i64: 1>, scalar_prefetch = 0 : i64, scratch_operands = 0 : i64, tpu.core_type = #tpu.core_type<tc>, window_params = [{pipeline_mode = #tpu.pipeline_mode<synchronous>, transform_indices = @transform_0, window_bounds = array<i64: 2, 128>}, {pipeline_mode = #tpu.pipeline_mode<synchronous>, transform_indices = @transform_1, window_bounds = array<i64: 2, 6>}]} {
    %c0 = arith.constant 0 : index
    %c0_0 = arith.constant 0 : index
    %0 = vector.load %arg1[%c0, %c0_0] : memref<2x128xf32, #tpu.memory_space<vmem>>, vector<2x128xf32>
    %1 = vector.extract_strided_slice %0 {offsets = [0, 0], sizes = [2, 6], strides = [1, 1]} : vector<2x128xf32> to vector<2x6xf32>
    %2 = vector.extract_strided_slice %0 {offsets = [0, 6], sizes = [2, 1], strides = [1, 1]} : vector<2x128xf32> to vector<2x1xf32>
    %3 = vector.broadcast %2 : vector<2x1xf32> to vector<2x6xf32>
    %4 = arith.addf %3, %1 : vector<2x6xf32>
    %5 = vector.shape_cast %1 : vector<2x6xf32> to vector<1x2x6xf32>
    %cst = arith.constant dense<0.000000e+00> : vector<1xf32>
    %6 = vector.multi_reduction <add>, %5, %cst [1, 2] : vector<1x2x6xf32> to vector<1xf32>
    %7 = vector.shape_cast %6 : vector<1xf32> to vector<1x1x1xf32>
    %8 = vector.extract %7[0, 0, 0] : f32 from vector<1x1x1xf32>
    %cst_1 = arith.constant 1.200000e+01 : f32
    %9 = arith.divf %8, %cst_1 : f32
    %10 = vector.broadcast %9 : f32 to vector<2x6xf32>
    %11 = arith.subf %4, %10 : vector<2x6xf32>
    %c0_2 = arith.constant 0 : index
    %c0_3 = arith.constant 0 : index
    %12 = vector.load %arg2[%c0_2, %c0_3] : memref<2x6xf32, #tpu.memory_space<vmem>>, vector<2x6xf32>
    tpu.vector_store %arg2[%c0_2, %c0_3], %11 {strides = array<i32>} : memref<2x6xf32, #tpu.memory_space<vmem>>, vector<2x6xf32>,
    return
  }
  func.func @transform_0(%arg0: i32) -> (i32, i32) {
    %c0_i32 = arith.constant 0 : i32
    %c0_i32_0 = arith.constant 0 : i32
    %c0_i32_1 = arith.constant 0 : i32
    return %c0_i32, %c0_i32_0 : i32, i32
  }
  func.func @transform_1(%arg0: i32) -> (i32, i32) {
    %c0_i32 = arith.constant 0 : i32
    %c0_i32_0 = arith.constant 0 : i32
    %c0_i32_1 = arith.constant 0 : i32
    return %c0_i32, %c0_i32_0 : i32, i32
  }
}

</mosaic_0001>

<llo_original>
// kernel: dueling_dqn_forward.5
$region0: #{dueling_dqn_forward.5}
  #allocation0 [shape = 'u32[]', space=smem, size = 0x4, offset = 0x4, fixed_abs, tag = 'smem constant byte address 0x4 - core index']
  #allocation1 [shape = 'u32[144,128]{1,0:T(1,128)}', space=vmem, size = 0x12000, scoped, tag = 'internal scratch']
  %s0 = inlined_call_operand.vmem [shape: bf16[200,256], index: 0, kind: input, shape index: {}]
  %s1 = inlined_call_operand.vmem [shape: bf16[256,32], index: 1, kind: input, shape index: {}]
  %s2 = inlined_call_operand.vmem [shape: f32[1,32], index: 2, kind: input, shape index: {}]
  %s3 = inlined_call_operand.vmem [shape: bf16[200,32], index: 3, kind: output, shape index: {}]
  %s4 = sld [smem:[#allocation0]]
  $region22: #{dueling_dqn_forward.5} parent=0
    _
  %s6 = ssub.s32 1, %s4
  %s7 = scalar_select 0, %s6, %s4
  // Predicated region
  $region2: #{dueling_dqn_forward.5} parent=0 // pred_check
    _
  $region3: #{dueling_dqn_forward.5} parent=0 // pred_check_branch
    %9 = sbr.rel (0) target = $region5
  $region4: #{dueling_dqn_forward.5} parent=0 // pred_region
    _
  $region5: #{dueling_dqn_forward.5} parent=0 // pred_fallthru
    _
  // Predicated region
  $region6: #{dueling_dqn_forward.5} parent=0 // pred_check
    _
  $region7: #{dueling_dqn_forward.5} parent=0 // pred_check_branch
    %11 = sbr.rel (0) target = $region9
  $region8: #{dueling_dqn_forward.5} parent=0 // pred_region
    _
  $region9: #{dueling_dqn_forward.5} parent=0 // pred_fallthru
    _
  // Predicated region
  $region10: #{dueling_dqn_forward.5} parent=0 // pred_check
    _
  $region11: #{dueling_dqn_forward.5} parent=0 // pred_check_branch
    %13 = sbr.rel (0) target = $region13
  $region12: #{dueling_dqn_forward.5} parent=0 // pred_region
    _
  $region13: #{dueling_dqn_forward.5} parent=0 // pred_fallthru
    _
  %v15 = vld [vmem:[%s0] sm:$0xff]
  %v16 = vld [vmem:[%s0 + $0x8] sm:$0xff]
  %v17 = vld [vmem:[%s0 + $0x10] sm:$0xff]
  %v18 = vld [vmem:[%s0 + $0x18] sm:$0xff]
  %v19 = vld [vmem:[%s0 + $0x20] sm:$0xff]
  %v20 = vld [vmem:[%s0 + $0x28] sm:$0xff]
  %v21 = vld [vmem:[%s0 + $0x30] sm:$0xff]
  %v22 = vld [vmem:[%s0 + $0x38] sm:$0xff]
  %v23 = vld [vmem:[%s0 + $0x40] sm:$0xff]
  %v24 = vld [vmem:[%s0 + $0x48] sm:$0xff]
  %v25 = vld [vmem:[%s0 + $0x50] sm:$0xff]
  %v26 = vld [vmem:[%s0 + $0x58] sm:$0xff]
  %v27 = vld [vmem:[%s0 + $0x60] sm:$0xff]
  %v28 = vld [vmem:[%s0 + $0x68] sm:$0xff]
  %v29 = vld [vmem:[%s0 + $0x70] sm:$0xff]
  %v30 = vld [vmem:[%s0 + $0x78] sm:$0xff]
  %v31 = vld [vmem:[%s0 + $0x80] sm:$0xff]
  %v32 = vld [vmem:[%s0 + $0x88] sm:$0xff]
  %v33 = vld [vmem:[%s0 + $0x90] sm:$0xff]
  %v34 = vld [vmem:[%s0 + $0x98] sm:$0xff]
  %v35 = vld [vmem:[%s0 + $0xa0] sm:$0xff]
  %v36 = vld [vmem:[%s0 + $0xa8] sm:$0xff]
  %v37 = vld [vmem:[%s0 + $0xb0] sm:$0xff]
  %v38 = vld [vmem:[%s0 + $0xb8] sm:$0xff]
  %v39 = vld [vmem:[%s0 + $0xc0] sm:$0xff]
  %v40 = vld [vmem:[%s1] sm:$0xf]
  %v41 = vld [vmem:[%s1 + $0x4] sm:$0xf]
  %v42 = vld [vmem:[%s1 + $0x8] sm:$0xf]
  %v43 = vld [vmem:[%s1 + $0xc] sm:$0xf]
  %v44 = vld [vmem:[%s1 + $0x10] sm:$0xf]
  %v45 = vld [vmem:[%s1 + $0x14] sm:$0xf]
  %v46 = vld [vmem:[%s1 + $0x18] sm:$0xf]
  %v47 = vld [vmem:[%s1 + $0x1c] sm:$0xf]
  %v48 = vld [vmem:[%s1 + $0x20] sm:$0xf]
  %v49 = vld [vmem:[%s1 + $0x24] sm:$0xf]
  %v50 = vld [vmem:[%s1 + $0x28] sm:$0xf]
  %v51 = vld [vmem:[%s1 + $0x2c] sm:$0xf]
  %v52 = vld [vmem:[%s1 + $0x30] sm:$0xf]
  %v53 = vld [vmem:[%s1 + $0x34] sm:$0xf]
  %v54 = vld [vmem:[%s1 + $0x38] sm:$0xf]
  %v55 = vld [vmem:[%s1 + $0x3c] sm:$0xf]
  %v56 = vld [vmem:[%s1 + $0x40] sm:$0xf]
  %v57 = vld [vmem:[%s1 + $0x44] sm:$0xf]
  %v58 = vld [vmem:[%s1 + $0x48] sm:$0xf]
  %v59 = vld [vmem:[%s1 + $0x4c] sm:$0xf]
  %v60 = vld [vmem:[%s1 + $0x50] sm:$0xf]
  %v61 = vld [vmem:[%s1 + $0x54] sm:$0xf]
  %v62 = vld [vmem:[%s1 + $0x58] sm:$0xf]
  %v63 = vld [vmem:[%s1 + $0x5c] sm:$0xf]
  %v64 = vld [vmem:[%s1 + $0x60] sm:$0xf]
  %v65 = vld [vmem:[%s1 + $0x64] sm:$0xf]
  %v66 = vld [vmem:[%s1 + $0x68] sm:$0xf]
  %v67 = vld [vmem:[%s1 + $0x6c] sm:$0xf]
  %v68 = vld [vmem:[%s1 + $0x70] sm:$0xf]
  %v69 = vld [vmem:[%s1 + $0x74] sm:$0xf]
  %v70 = vld [vmem:[%s1 + $0x78] sm:$0xf]
  %v71 = vld [vmem:[%s1 + $0x7c] sm:$0xf]
  %v72 = vld [vmem:[%s2] sm:$0x1]
  %v74 = vlaneseq
  %v75 = vshrl.u32 %v74, 7
  %v76 = vsub.s32 0, %v75
  %v77 = vrot.slane %v72, %v76
  %v104 = vunpack.c.l.b16 %v15
  %v105 = vunpack.c.h.b16 %v15
  %v106 = vunpack.c.l.b16 %v16
  %v107 = vunpack.c.h.b16 %v16
  %v108 = vunpack.c.l.b16 %v17
  %v109 = vunpack.c.h.b16 %v17
  %v110 = vunpack.c.l.b16 %v18
  %v111 = vunpack.c.h.b16 %v18
  %v112 = vunpack.c.l.b16 %v19
  %v113 = vunpack.c.h.b16 %v19
  %v114 = vunpack.c.l.b16 %v20
  %v115 = vunpack.c.h.b16 %v20
  %v116 = vunpack.c.l.b16 %v21
  %v117 = vunpack.c.h.b16 %v21
  %v118 = vunpack.c.l.b16 %v22
  %v119 = vunpack.c.h.b16 %v22
  %v120 = vunpack.c.l.b16 %v23
  %v121 = vunpack.c.h.b16 %v23
  %v122 = vunpack.c.l.b16 %v24
  %v123 = vunpack.c.h.b16 %v24
  %v124 = vunpack.c.l.b16 %v25
  %v125 = vunpack.c.h.b16 %v25
  %v126 = vunpack.c.l.b16 %v26
  %v127 = vunpack.c.h.b16 %v26
  %v128 = vunpack.c.l.b16 %v27
  %v129 = vunpack.c.h.b16 %v27
  %v130 = vunpack.c.l.b16 %v28
  %v131 = vunpack.c.h.b16 %v28
  %v132 = vunpack.c.l.b16 %v29
  %v133 = vunpack.c.h.b16 %v29
  %v134 = vunpack.c.l.b16 %v30
  %v135 = vunpack.c.h.b16 %v30
  %v136 = vunpack.c.l.b16 %v31
  %v137 = vunpack.c.h.b16 %v31
  %v138 = vunpack.c.l.b16 %v32
  %v139 = vunpack.c.h.b16 %v32
  %v140 = vunpack.c.l.b16 %v33
  %v141 = vunpack.c.h.b16 %v33
  %v142 = vunpack.c.l.b16 %v34
  %v143 = vunpack.c.h.b16 %v34
  %v144 = vunpack.c.l.b16 %v35
  %v145 = vunpack.c.h.b16 %v35
  %v146 = vunpack.c.l.b16 %v36
  %v147 = vunpack.c.h.b16 %v36
  %v148 = vunpack.c.l.b16 %v37
  %v149 = vunpack.c.h.b16 %v37
  %v150 = vunpack.c.l.b16 %v38
  %v151 = vunpack.c.h.b16 %v38
  %v152 = vunpack.c.l.b16 %v39
  %v153 = vunpack.c.h.b16 %v39
  %v154 = vpack.c.b16 %v106, %v104
  %v155 = vpack.c.b16 %v107, %v105
  %v156 = vpack.c.b16 %v110, %v108
  %v157 = vpack.c.b16 %v111, %v109
  %v158 = vpack.c.b16 %v114, %v112
  %v159 = vpack.c.b16 %v115, %v113
  %v160 = vpack.c.b16 %v118, %v116
  %v161 = vpack.c.b16 %v119, %v117
  %v162 = vpack.c.b16 %v122, %v120
  %v163 = vpack.c.b16 %v123, %v121
  %v164 = vpack.c.b16 %v126, %v124
  %v165 = vpack.c.b16 %v127, %v125
  %v166 = vpack.c.b16 %v130, %v128
  %v167 = vpack.c.b16 %v131, %v129
  %v168 = vpack.c.b16 %v134, %v132
  %v169 = vpack.c.b16 %v135, %v133
  %v170 = vpack.c.b16 %v138, %v136
  %v171 = vpack.c.b16 %v139, %v137
  %v172 = vpack.c.b16 %v142, %v140
  %v173 = vpack.c.b16 %v143, %v141
  %v174 = vpack.c.b16 %v146, %v144
  %v175 = vpack.c.b16 %v147, %v145
  %v176 = vpack.c.b16 %v150, %v148
  %v177 = vpack.c.b16 %v151, %v149
  %v178 = vpack.c.b16 %v152, %v152
  %v179 = vpack.c.b16 %v153, %v153
  %v238 = vunpack.c.l.b16 %v40
  %v239 = vunpack.c.l.b16 %v41
  %v240 = vunpack.c.l.b16 %v42
  %v241 = vunpack.c.l.b16 %v43
  %v242 = vunpack.c.l.b16 %v44
  %v243 = vunpack.c.l.b16 %v45
  %v244 = vunpack.c.l.b16 %v46
  %v245 = vunpack.c.l.b16 %v47
  %v246 = vunpack.c.l.b16 %v48
  %v247 = vunpack.c.l.b16 %v49
  %v248 = vunpack.c.l.b16 %v50
  %v249 = vunpack.c.l.b16 %v51
  %v250 = vunpack.c.l.b16 %v52
  %v251 = vunpack.c.l.b16 %v53
  %v252 = vunpack.c.l.b16 %v54
  %v253 = vunpack.c.l.b16 %v55
  %v254 = vunpack.c.l.b16 %v56
  %v255 = vunpack.c.l.b16 %v57
  %v256 = vunpack.c.l.b16 %v58
  %v257 = vunpack.c.l.b16 %v59
  %v258 = vunpack.c.l.b16 %v60
  %v259 = vunpack.c.l.b16 %v61
  %v260 = vunpack.c.l.b16 %v62
  %v261 = vunpack.c.l.b16 %v63
  %v262 = vunpack.c.l.b16 %v64
  %v263 = vunpack.c.l.b16 %v65
  %v264 = vunpack.c.l.b16 %v66
  %v265 = vunpack.c.l.b16 %v67
  %v266 = vunpack.c.l.b16 %v68
  %v267 = vunpack.c.l.b16 %v69
  %v268 = vunpack.c.l.b16 %v70
  %v269 = vunpack.c.l.b16 %v71
  %v270 = vpack.c.b16 %v239, %v238
  %v271 = vpack.c.b16 %v241, %v240
  %v272 = vpack.c.b16 %v243, %v242
  %v273 = vpack.c.b16 %v245, %v244
  %v274 = vpack.c.b16 %v247, %v246
  %v275 = vpack.c.b16 %v249, %v248
  %v276 = vpack.c.b16 %v251, %v250
  %v277 = vpack.c.b16 %v253, %v252
  %v278 = vpack.c.b16 %v255, %v254
  %v279 = vpack.c.b16 %v257, %v256
  %v280 = vpack.c.b16 %v259, %v258
  %v281 = vpack.c.b16 %v261, %v260
  %v282 = vpack.c.b16 %v263, %v262
  %v283 = vpack.c.b16 %v265, %v264
  %v284 = vpack.c.b16 %v267, %v266
  %v285 = vpack.c.b16 %v269, %v268
  %302 = vmatprep.subr.bf16.mxu0 0
  %303 = vmatpush1.bf16.msra.mxu0 %v277
  %304 = vmatprep.subr.bf16.mxu0 0
  %305 = vmatpush1.bf16.msra.mxu0 %v276
  %306 = vmatprep.subr.bf16.mxu0 0
  %307 = vmatpush1.bf16.msra.mxu0 %v275
  %308 = vmatprep.subr.bf16.mxu0 0
  %309 = vmatpush1.bf16.msra.mxu0 %v274
  %310 = vmatprep.subr.bf16.mxu0 0
  %311 = vmatpush1.bf16.msra.mxu0 %v273
  %312 = vmatprep.subr.bf16.mxu0 0
  %313 = vmatpush1.bf16.msra.mxu0 %v272
  %314 = vmatprep.subr.bf16.mxu0 0
  %315 = vmatpush1.bf16.msra.mxu0 %v271
  %316 = vmatprep.subr.bf16.mxu0 0
  %317 = vmatpush1.bf16.msra.mxu0 %v270
  %318 = vmatprep.subr.bf16.mxu0 0
  %319 = vmatpush2.bf16.msra.mxu0 %v285
  %320 = vmatprep.subr.bf16.mxu0 0
  %321 = vmatpush2.bf16.msra.mxu0 %v284
  %322 = vmatprep.subr.bf16.mxu0 0
  %323 = vmatpush2.bf16.msra.mxu0 %v283
  %324 = vmatprep.subr.bf16.mxu0 0
  %325 = vmatpush2.bf16.msra.mxu0 %v282
  %326 = vmatprep.subr.bf16.mxu0 0
  %327 = vmatpush2.bf16.msra.mxu0 %v281
  %328 = vmatprep.subr.bf16.mxu0 0
  %329 = vmatpush2.bf16.msra.mxu0 %v280
  %330 = vmatprep.subr.bf16.mxu0 0
  %331 = vmatpush2.bf16.msra.mxu0 %v279
  %332 = vmatprep.subr.bf16.mxu0 0
  %333 = vmatpush2.bf16.msra.mxu0 %v278
  %334 = vmatprep.mubr.bf16.mxu0 %v155
  %335 = vmatmul.mubr.bf16.gmra.mxu0 %v154
  %v336 = vpop.f32.mrf.mxu0
  %v337 = vadd.f32 %v77, %v336
  %v338 = vpop.f32.mrf.mxu0
  %v339 = vpop.f32.mrf.mxu0
  %v340 = vadd.f32 %v77, %v339
  %v341 = vpop.f32.mrf.mxu0
  %342 = vmatprep.mubr.bf16.mxu0 %v157
  %343 = vmatmul.mubr.bf16.gmra.mxu0 %v156
  %v344 = vpop.f32.mrf.mxu0
  %v345 = vadd.f32 %v77, %v344
  %v346 = vpop.f32.mrf.mxu0
  %v347 = vpop.f32.mrf.mxu0
  %v348 = vadd.f32 %v77, %v347
  %v349 = vpop.f32.mrf.mxu0
  %350 = vmatprep.mubr.bf16.mxu0 %v159
  %351 = vmatmul.mubr.bf16.gmra.mxu0 %v158
  %v352 = vpop.f32.mrf.mxu0
  %v353 = vadd.f32 %v77, %v352
  %v354 = vpop.f32.mrf.mxu0
  %v355 = vpop.f32.mrf.mxu0
  %v356 = vadd.f32 %v77, %v355
  %v357 = vpop.f32.mrf.mxu0
  %358 = vmatprep.mubr.bf16.mxu0 %v161
  %359 = vmatmul.mubr.bf16.gmra.mxu0 %v160
  %v360 = vpop.f32.mrf.mxu0
  %v361 = vadd.f32 %v77, %v360
  %v362 = vpop.f32.mrf.mxu0
  %v363 = vpop.f32.mrf.mxu0
  %v364 = vadd.f32 %v77, %v363
  %v365 = vpop.f32.mrf.mxu0
  %366 = vmatprep.mubr.bf16.mxu0 %v163
  %367 = vmatmul.mubr.bf16.gmra.mxu0 %v162
  %v368 = vpop.f32.mrf.mxu0
  %v369 = vadd.f32 %v77, %v368
  %v370 = vpop.f32.mrf.mxu0
  %v371 = vpop.f32.mrf.mxu0
  %v372 = vadd.f32 %v77, %v371
  %v373 = vpop.f32.mrf.mxu0
  %374 = vmatprep.mubr.bf16.mxu0 %v165
  %375 = vmatmul.mubr.bf16.gmra.mxu0 %v164
  %v376 = vpop.f32.mrf.mxu0
  %v377 = vadd.f32 %v77, %v376
  %v378 = vpop.f32.mrf.mxu0
  %v379 = vpop.f32.mrf.mxu0
  %v380 = vadd.f32 %v77, %v379
  %v381 = vpop.f32.mrf.mxu0
  %382 = vmatprep.mubr.bf16.mxu0 %v167
  %383 = vmatmul.mubr.bf16.gmra.mxu0 %v166
  %v384 = vpop.f32.mrf.mxu0
  %v385 = vadd.f32 %v77, %v384
  %v386 = vpop.f32.mrf.mxu0
  %v387 = vpop.f32.mrf.mxu0
  %v388 = vadd.f32 %v77, %v387
  %v389 = vpop.f32.mrf.mxu0
  %390 = vmatprep.mubr.bf16.mxu0 %v169
  %391 = vmatmul.mubr.bf16.gmra.mxu0 %v168
  %v392 = vpop.f32.mrf.mxu0
  %v393 = vadd.f32 %v77, %v392
  %v394 = vpop.f32.mrf.mxu0
  %v395 = vpop.f32.mrf.mxu0
  %v396 = vadd.f32 %v77, %v395
  %v397 = vpop.f32.mrf.mxu0
  %398 = vmatprep.mubr.bf16.mxu0 %v171
  %399 = vmatmul.mubr.bf16.gmra.mxu0 %v170
  %v400 = vpop.f32.mrf.mxu0
  %v401 = vadd.f32 %v77, %v400
  %v402 = vpop.f32.mrf.mxu0
  %v403 = vpop.f32.mrf.mxu0
  %v404 = vadd.f32 %v77, %v403
  %v405 = vpop.f32.mrf.mxu0
  %406 = vmatprep.mubr.bf16.mxu0 %v173
  %407 = vmatmul.mubr.bf16.gmra.mxu0 %v172
  %v408 = vpop.f32.mrf.mxu0
  %v409 = vadd.f32 %v77, %v408
  %v410 = vpop.f32.mrf.mxu0
  %v411 = vpop.f32.mrf.mxu0
  %v412 = vadd.f32 %v77, %v411
  %v413 = vpop.f32.mrf.mxu0
  %414 = vmatprep.mubr.bf16.mxu0 %v175
  %415 = vmatmul.mubr.bf16.gmra.mxu0 %v174
  %v416 = vpop.f32.mrf.mxu0
  %v417 = vadd.f32 %v77, %v416
  %v418 = vpop.f32.mrf.mxu0
  %v419 = vpop.f32.mrf.mxu0
  %v420 = vadd.f32 %v77, %v419
  %v421 = vpop.f32.mrf.mxu0
  %422 = vmatprep.mubr.bf16.mxu0 %v177
  %423 = vmatmul.mubr.bf16.gmra.mxu0 %v176
  %v424 = vpop.f32.mrf.mxu0
  %v425 = vadd.f32 %v77, %v424
  %v426 = vpop.f32.mrf.mxu0
  %v427 = vpop.f32.mrf.mxu0
  %v428 = vadd.f32 %v77, %v427
  %v429 = vpop.f32.mrf.mxu0
  %430 = vmatprep.mubr.bf16.mxu0 %v179
  %431 = vmatmul.mubr.bf16.gmra.mxu0 %v178
  %v432 = vpop.f32.mrf.mxu0
  %v433 = vadd.f32 %v77, %v432
  %v434 = vpop.f32.mrf.mxu0
  %v435 = vpop.f32.mrf.mxu0
  %v436 = vpop.f32.mrf.mxu0
  %437 = vdwg.mxu0
  %v438 = vmax.f32 %v337, 0.0
  %v439 = vmax.f32 %v340, 0.0
  %v440 = vmax.f32 %v345, 0.0
  %v441 = vmax.f32 %v348, 0.0
  %v442 = vmax.f32 %v353, 0.0
  %v443 = vmax.f32 %v356, 0.0
  %v444 = vmax.f32 %v361, 0.0
  %v445 = vmax.f32 %v364, 0.0
  %v446 = vmax.f32 %v369, 0.0
  %v447 = vmax.f32 %v372, 0.0
  %v448 = vmax.f32 %v377, 0.0
  %v449 = vmax.f32 %v380, 0.0
  %v450 = vmax.f32 %v385, 0.0
  %v451 = vmax.f32 %v388, 0.0
  %v452 = vmax.f32 %v393, 0.0
  %v453 = vmax.f32 %v396, 0.0
  %v454 = vmax.f32 %v401, 0.0
  %v455 = vmax.f32 %v404, 0.0
  %v456 = vmax.f32 %v409, 0.0
  %v457 = vmax.f32 %v412, 0.0
  %v458 = vmax.f32 %v417, 0.0
  %v459 = vmax.f32 %v420, 0.0
  %v460 = vmax.f32 %v425, 0.0
  %v461 = vmax.f32 %v428, 0.0
  %v462 = vmax.f32 %v433, 0.0
  %v463 = vpack.c.bf16 %v439, %v438
  %v464 = vpack.c.bf16 %v441, %v440
  %v465 = vpack.c.bf16 %v443, %v442
  %v466 = vpack.c.bf16 %v445, %v444
  %v467 = vpack.c.bf16 %v447, %v446
  %v468 = vpack.c.bf16 %v449, %v448
  %v469 = vpack.c.bf16 %v451, %v450
  %v470 = vpack.c.bf16 %v453, %v452
  %v471 = vpack.c.bf16 %v455, %v454
  %v472 = vpack.c.bf16 %v457, %v456
  %v473 = vpack.c.bf16 %v459, %v458
  %v474 = vpack.c.bf16 %v461, %v460
  %v475 = vpack.c.bf16 %v462, %v462
  %v489 = vunpack.c.l.b16 %v463
  %v490 = vunpack.c.h.b16 %v463
  %v491 = vunpack.c.l.b16 %v464
  %v492 = vunpack.c.h.b16 %v464
  %v493 = vunpack.c.l.b16 %v465
  %v494 = vunpack.c.h.b16 %v465
  %v495 = vunpack.c.l.b16 %v466
  %v496 = vunpack.c.h.b16 %v466
  %v497 = vunpack.c.l.b16 %v467
  %v498 = vunpack.c.h.b16 %v467
  %v499 = vunpack.c.l.b16 %v468
  %v500 = vunpack.c.h.b16 %v468
  %v501 = vunpack.c.l.b16 %v469
  %v502 = vunpack.c.h.b16 %v469
  %v503 = vunpack.c.l.b16 %v470
  %v504 = vunpack.c.h.b16 %v470
  %v505 = vunpack.c.l.b16 %v471
  %v506 = vunpack.c.h.b16 %v471
  %v507 = vunpack.c.l.b16 %v472
  %v508 = vunpack.c.h.b16 %v472
  %v509 = vunpack.c.l.b16 %v473
  %v510 = vunpack.c.h.b16 %v473
  %v511 = vunpack.c.l.b16 %v474
  %v512 = vunpack.c.h.b16 %v474
  %v513 = vunpack.c.l.b16 %v475
  %v514 = vpack.c.b16 %v489, %v489
  %v515 = vpack.c.b16 %v490, %v490
  %v516 = vpack.c.b16 %v491, %v491
  %v517 = vpack.c.b16 %v492, %v492
  %v518 = vpack.c.b16 %v493, %v493
  %v519 = vpack.c.b16 %v494, %v494
  %v520 = vpack.c.b16 %v495, %v495
  %v521 = vpack.c.b16 %v496, %v496
  %v522 = vpack.c.b16 %v497, %v497
  %v523 = vpack.c.b16 %v498, %v498
  %v524 = vpack.c.b16 %v499, %v499
  %v525 = vpack.c.b16 %v500, %v500
  %v526 = vpack.c.b16 %v501, %v501
  %v527 = vpack.c.b16 %v502, %v502
  %v528 = vpack.c.b16 %v503, %v503
  %v529 = vpack.c.b16 %v504, %v504
  %v530 = vpack.c.b16 %v505, %v505
  %v531 = vpack.c.b16 %v506, %v506
  %v532 = vpack.c.b16 %v507, %v507
  %v533 = vpack.c.b16 %v508, %v508
  %v534 = vpack.c.b16 %v509, %v509
  %v535 = vpack.c.b16 %v510, %v510
  %v536 = vpack.c.b16 %v511, %v511
  %v537 = vpack.c.b16 %v512, %v512
  %v538 = vpack.c.b16 %v513, %v513
  %vm564 = vcmask 257024
  %565 = vst.msk [vmem:[%s3] sm:$0xf] %vm564, %v514
  %566 = vst.msk [vmem:[%s3 + $0x4] sm:$0xf] %vm564, %v515
  %567 = vst.msk [vmem:[%s3 + $0x8] sm:$0xf] %vm564, %v516
  %568 = vst.msk [vmem:[%s3 + $0xc] sm:$0xf] %vm564, %v517
  %569 = vst.msk [vmem:[%s3 + $0x10] sm:$0xf] %vm564, %v518
  %570 = vst.msk [vmem:[%s3 + $0x14] sm:$0xf] %vm564, %v519
  %571 = vst.msk [vmem:[%s3 + $0x18] sm:$0xf] %vm564, %v520
  %572 = vst.msk [vmem:[%s3 + $0x1c] sm:$0xf] %vm564, %v521
  %573 = vst.msk [vmem:[%s3 + $0x20] sm:$0xf] %vm564, %v522
  %574 = vst.msk [vmem:[%s3 + $0x24] sm:$0xf] %vm564, %v523
  %575 = vst.msk [vmem:[%s3 + $0x28] sm:$0xf] %vm564, %v524
  %576 = vst.msk [vmem:[%s3 + $0x2c] sm:$0xf] %vm564, %v525
  %577 = vst.msk [vmem:[%s3 + $0x30] sm:$0xf] %vm564, %v526
  %578 = vst.msk [vmem:[%s3 + $0x34] sm:$0xf] %vm564, %v527
  %579 = vst.msk [vmem:[%s3 + $0x38] sm:$0xf] %vm564, %v528
  %580 = vst.msk [vmem:[%s3 + $0x3c] sm:$0xf] %vm564, %v529
  %581 = vst.msk [vmem:[%s3 + $0x40] sm:$0xf] %vm564, %v530
  %582 = vst.msk [vmem:[%s3 + $0x44] sm:$0xf] %vm564, %v531
  %583 = vst.msk [vmem:[%s3 + $0x48] sm:$0xf] %vm564, %v532
  %584 = vst.msk [vmem:[%s3 + $0x4c] sm:$0xf] %vm564, %v533
  %585 = vst.msk [vmem:[%s3 + $0x50] sm:$0xf] %vm564, %v534
  %586 = vst.msk [vmem:[%s3 + $0x54] sm:$0xf] %vm564, %v535
  %587 = vst.msk [vmem:[%s3 + $0x58] sm:$0xf] %vm564, %v536
  %588 = vst.msk [vmem:[%s3 + $0x5c] sm:$0xf] %vm564, %v537
  %589 = vst.msk [vmem:[%s3 + $0x60] sm:$0xf] %vm564, %v538
  // Predicated region
  $region14: #{dueling_dqn_forward.5} parent=0 // pred_check
    _
  $region15: #{dueling_dqn_forward.5} parent=0 // pred_check_branch
    %591 = sbr.rel (0) target = $region17
  $region16: #{dueling_dqn_forward.5} parent=0 // pred_region
    _
  $region17: #{dueling_dqn_forward.5} parent=0 // pred_fallthru
    _
  // Predicated region
  $region18: #{dueling_dqn_forward.5} parent=0 // pred_check
    _
  $region19: #{dueling_dqn_forward.5} parent=0 // pred_check_branch
    %593 = sbr.rel (0) target = $region21
  $region20: #{dueling_dqn_forward.5} parent=0 // pred_region
    _
  $region21: #{dueling_dqn_forward.5} parent=0 // pred_fallthru
    _

// kernel: dueling_dqn_forward.6
$region0: #{dueling_dqn_forward.6}
  #allocation0 [shape = 'u32[]', space=smem, size = 0x4, offset = 0x4, fixed_abs, tag = 'smem constant byte address 0x4 - core index']
  #allocation1 [shape = 'u32[144,128]{1,0:T(1,128)}', space=vmem, size = 0x12000, scoped, tag = 'internal scratch']
  %s0 = inlined_call_operand.vmem [shape: bf16[32,512], index: 0, kind: input, shape index: {}]
  %s1 = inlined_call_operand.vmem [shape: bf16[512,64], index: 1, kind: input, shape index: {}]
  %s2 = inlined_call_operand.vmem [shape: f32[1,64], index: 2, kind: input, shape index: {}]
  %s3 = inlined_call_operand.vmem [shape: bf16[32,64], index: 3, kind: output, shape index: {}]
  %s4 = sld [smem:[#allocation0]]
  $region22: #{dueling_dqn_forward.6} parent=0
    _
  %s6 = ssub.s32 1, %s4
  %s7 = scalar_select 0, %s6, %s4
  // Predicated region
  $region2: #{dueling_dqn_forward.6} parent=0 // pred_check
    _
  $region3: #{dueling_dqn_forward.6} parent=0 // pred_check_branch
    %9 = sbr.rel (0) target = $region5
  $region4: #{dueling_dqn_forward.6} parent=0 // pred_region
    _
  $region5: #{dueling_dqn_forward.6} parent=0 // pred_fallthru
    _
  // Predicated region
  $region6: #{dueling_dqn_forward.6} parent=0 // pred_check
    _
  $region7: #{dueling_dqn_forward.6} parent=0 // pred_check_branch
    %11 = sbr.rel (0) target = $region9
  $region8: #{dueling_dqn_forward.6} parent=0 // pred_region
    _
  $region9: #{dueling_dqn_forward.6} parent=0 // pred_fallthru
    _
  // Predicated region
  $region10: #{dueling_dqn_forward.6} parent=0 // pred_check
    _
  $region11: #{dueling_dqn_forward.6} parent=0 // pred_check_branch
    %13 = sbr.rel (0) target = $region13
  $region12: #{dueling_dqn_forward.6} parent=0 // pred_region
    _
  $region13: #{dueling_dqn_forward.6} parent=0 // pred_fallthru
    _
  %v15 = vld [vmem:[%s0] sm:$0xff]
  %v16 = vld [vmem:[%s0 + $0x8] sm:$0xff]
  %v17 = vld [vmem:[%s0 + $0x10] sm:$0xff]
  %v18 = vld [vmem:[%s0 + $0x18] sm:$0xff]
  %v19 = vld [vmem:[%s0 + $0x20] sm:$0xff]
  %v20 = vld [vmem:[%s0 + $0x28] sm:$0xff]
  %v21 = vld [vmem:[%s0 + $0x30] sm:$0xff]
  %v22 = vld [vmem:[%s0 + $0x38] sm:$0xff]
  %v23 = vld [vmem:[%s1] sm:$0xf]
  %v24 = vld [vmem:[%s1 + $0x4] sm:$0xf]
  %v25 = vld [vmem:[%s1 + $0x8] sm:$0xf]
  %v26 = vld [vmem:[%s1 + $0xc] sm:$0xf]
  %v27 = vld [vmem:[%s1 + $0x10] sm:$0xf]
  %v28 = vld [vmem:[%s1 + $0x14] sm:$0xf]
  %v29 = vld [vmem:[%s1 + $0x18] sm:$0xf]
  %v30 = vld [vmem:[%s1 + $0x1c] sm:$0xf]
  %v31 = vld [vmem:[%s1 + $0x20] sm:$0xf]
  %v32 = vld [vmem:[%s1 + $0x24] sm:$0xf]
  %v33 = vld [vmem:[%s1 + $0x28] sm:$0xf]
  %v34 = vld [vmem:[%s1 + $0x2c] sm:$0xf]
  %v35 = vld [vmem:[%s1 + $0x30] sm:$0xf]
  %v36 = vld [vmem:[%s1 + $0x34] sm:$0xf]
  %v37 = vld [vmem:[%s1 + $0x38] sm:$0xf]
  %v38 = vld [vmem:[%s1 + $0x3c] sm:$0xf]
  %v39 = vld [vmem:[%s1 + $0x40] sm:$0xf]
  %v40 = vld [vmem:[%s1 + $0x44] sm:$0xf]
  %v41 = vld [vmem:[%s1 + $0x48] sm:$0xf]
  %v42 = vld [vmem:[%s1 + $0x4c] sm:$0xf]
  %v43 = vld [vmem:[%s1 + $0x50] sm:$0xf]
  %v44 = vld [vmem:[%s1 + $0x54] sm:$0xf]
  %v45 = vld [vmem:[%s1 + $0x58] sm:$0xf]
  %v46 = vld [vmem:[%s1 + $0x5c] sm:$0xf]
  %v47 = vld [vmem:[%s1 + $0x60] sm:$0xf]
  %v48 = vld [vmem:[%s1 + $0x64] sm:$0xf]
  %v49 = vld [vmem:[%s1 + $0x68] sm:$0xf]
  %v50 = vld [vmem:[%s1 + $0x6c] sm:$0xf]
  %v51 = vld [vmem:[%s1 + $0x70] sm:$0xf]
  %v52 = vld [vmem:[%s1 + $0x74] sm:$0xf]
  %v53 = vld [vmem:[%s1 + $0x78] sm:$0xf]
  %v54 = vld [vmem:[%s1 + $0x7c] sm:$0xf]
  %v55 = vld [vmem:[%s1 + $0x80] sm:$0xf]
  %v56 = vld [vmem:[%s1 + $0x84] sm:$0xf]
  %v57 = vld [vmem:[%s1 + $0x88] sm:$0xf]
  %v58 = vld [vmem:[%s1 + $0x8c] sm:$0xf]
  %v59 = vld [vmem:[%s1 + $0x90] sm:$0xf]
  %v60 = vld [vmem:[%s1 + $0x94] sm:$0xf]
  %v61 = vld [vmem:[%s1 + $0x98] sm:$0xf]
  %v62 = vld [vmem:[%s1 + $0x9c] sm:$0xf]
  %v63 = vld [vmem:[%s1 + $0xa0] sm:$0xf]
  %v64 = vld [vmem:[%s1 + $0xa4] sm:$0xf]
  %v65 = vld [vmem:[%s1 + $0xa8] sm:$0xf]
  %v66 = vld [vmem:[%s1 + $0xac] sm:$0xf]
  %v67 = vld [vmem:[%s1 + $0xb0] sm:$0xf]
  %v68 = vld [vmem:[%s1 + $0xb4] sm:$0xf]
  %v69 = vld [vmem:[%s1 + $0xb8] sm:$0xf]
  %v70 = vld [vmem:[%s1 + $0xbc] sm:$0xf]
  %v71 = vld [vmem:[%s1 + $0xc0] sm:$0xf]
  %v72 = vld [vmem:[%s1 + $0xc4] sm:$0xf]
  %v73 = vld [vmem:[%s1 + $0xc8] sm:$0xf]
  %v74 = vld [vmem:[%s1 + $0xcc] sm:$0xf]
  %v75 = vld [vmem:[%s1 + $0xd0] sm:$0xf]
  %v76 = vld [vmem:[%s1 + $0xd4] sm:$0xf]
  %v77 = vld [vmem:[%s1 + $0xd8] sm:$0xf]
  %v78 = vld [vmem:[%s1 + $0xdc] sm:$0xf]
  %v79 = vld [vmem:[%s1 + $0xe0] sm:$0xf]
  %v80 = vld [vmem:[%s1 + $0xe4] sm:$0xf]
  %v81 = vld [vmem:[%s1 + $0xe8] sm:$0xf]
  %v82 = vld [vmem:[%s1 + $0xec] sm:$0xf]
  %v83 = vld [vmem:[%s1 + $0xf0] sm:$0xf]
  %v84 = vld [vmem:[%s1 + $0xf4] sm:$0xf]
  %v85 = vld [vmem:[%s1 + $0xf8] sm:$0xf]
  %v86 = vld [vmem:[%s1 + $0xfc] sm:$0xf]
  %v87 = vld [vmem:[%s2] sm:$0x1]
  %v89 = vlaneseq
  %v90 = vshrl.u32 %v89, 7
  %v91 = vsub.s32 0, %v90
  %v92 = vrot.slane %v87, %v91
  %v102 = vunpack.c.l.b16 %v15
  %v103 = vunpack.c.h.b16 %v15
  %v104 = vunpack.c.l.b16 %v16
  %v105 = vunpack.c.h.b16 %v16
  %v106 = vunpack.c.l.b16 %v17
  %v107 = vunpack.c.h.b16 %v17
  %v108 = vunpack.c.l.b16 %v18
  %v109 = vunpack.c.h.b16 %v18
  %v110 = vunpack.c.l.b16 %v19
  %v111 = vunpack.c.h.b16 %v19
  %v112 = vunpack.c.l.b16 %v20
  %v113 = vunpack.c.h.b16 %v20
  %v114 = vunpack.c.l.b16 %v21
  %v115 = vunpack.c.h.b16 %v21
  %v116 = vunpack.c.l.b16 %v22
  %v117 = vunpack.c.h.b16 %v22
  %v118 = vpack.c.b16 %v106, %v102
  %v119 = vpack.c.b16 %v107, %v103
  %v120 = vpack.c.b16 %v108, %v104
  %v121 = vpack.c.b16 %v109, %v105
  %v122 = vpack.c.b16 %v114, %v110
  %v123 = vpack.c.b16 %v115, %v111
  %v124 = vpack.c.b16 %v116, %v112
  %v125 = vpack.c.b16 %v117, %v113
  %v198 = vunpack.c.l.b16 %v23
  %v199 = vunpack.c.l.b16 %v24
  %v200 = vunpack.c.l.b16 %v25
  %v201 = vunpack.c.l.b16 %v26
  %v202 = vunpack.c.l.b16 %v27
  %v203 = vunpack.c.l.b16 %v28
  %v204 = vunpack.c.l.b16 %v29
  %v205 = vunpack.c.l.b16 %v30
  %v206 = vunpack.c.l.b16 %v31
  %v207 = vunpack.c.l.b16 %v32
  %v208 = vunpack.c.l.b16 %v33
  %v209 = vunpack.c.l.b16 %v34
  %v210 = vunpack.c.l.b16 %v35
  %v211 = vunpack.c.l.b16 %v36
  %v212 = vunpack.c.l.b16 %v37
  %v213 = vunpack.c.l.b16 %v38
  %v214 = vunpack.c.l.b16 %v39
  %v215 = vunpack.c.l.b16 %v40
  %v216 = vunpack.c.l.b16 %v41
  %v217 = vunpack.c.l.b16 %v42
  %v218 = vunpack.c.l.b16 %v43
  %v219 = vunpack.c.l.b16 %v44
  %v220 = vunpack.c.l.b16 %v45
  %v221 = vunpack.c.l.b16 %v46
  %v222 = vunpack.c.l.b16 %v47
  %v223 = vunpack.c.l.b16 %v48
  %v224 = vunpack.c.l.b16 %v49
  %v225 = vunpack.c.l.b16 %v50
  %v226 = vunpack.c.l.b16 %v51
  %v227 = vunpack.c.l.b16 %v52
  %v228 = vunpack.c.l.b16 %v53
  %v229 = vunpack.c.l.b16 %v54
  %v230 = vunpack.c.l.b16 %v55
  %v231 = vunpack.c.l.b16 %v56
  %v232 = vunpack.c.l.b16 %v57
  %v233 = vunpack.c.l.b16 %v58
  %v234 = vunpack.c.l.b16 %v59
  %v235 = vunpack.c.l.b16 %v60
  %v236 = vunpack.c.l.b16 %v61
  %v237 = vunpack.c.l.b16 %v62
  %v238 = vunpack.c.l.b16 %v63
  %v239 = vunpack.c.l.b16 %v64
  %v240 = vunpack.c.l.b16 %v65
  %v241 = vunpack.c.l.b16 %v66
  %v242 = vunpack.c.l.b16 %v67
  %v243 = vunpack.c.l.b16 %v68
  %v244 = vunpack.c.l.b16 %v69
  %v245 = vunpack.c.l.b16 %v70
  %v246 = vunpack.c.l.b16 %v71
  %v247 = vunpack.c.l.b16 %v72
  %v248 = vunpack.c.l.b16 %v73
  %v249 = vunpack.c.l.b16 %v74
  %v250 = vunpack.c.l.b16 %v75
  %v251 = vunpack.c.l.b16 %v76
  %v252 = vunpack.c.l.b16 %v77
  %v253 = vunpack.c.l.b16 %v78
  %v254 = vunpack.c.l.b16 %v79
  %v255 = vunpack.c.l.b16 %v80
  %v256 = vunpack.c.l.b16 %v81
  %v257 = vunpack.c.l.b16 %v82
  %v258 = vunpack.c.l.b16 %v83
  %v259 = vunpack.c.l.b16 %v84
  %v260 = vunpack.c.l.b16 %v85
  %v261 = vunpack.c.l.b16 %v86
  %v262 = vpack.c.b16 %v199, %v198
  %v263 = vpack.c.b16 %v201, %v200
  %v264 = vpack.c.b16 %v203, %v202
  %v265 = vpack.c.b16 %v205, %v204
  %v266 = vpack.c.b16 %v207, %v206
  %v267 = vpack.c.b16 %v209, %v208
  %v268 = vpack.c.b16 %v211, %v210
  %v269 = vpack.c.b16 %v213, %v212
  %v270 = vpack.c.b16 %v215, %v214
  %v271 = vpack.c.b16 %v217, %v216
  %v272 = vpack.c.b16 %v219, %v218
  %v273 = vpack.c.b16 %v221, %v220
  %v274 = vpack.c.b16 %v223, %v222
  %v275 = vpack.c.b16 %v225, %v224
  %v276 = vpack.c.b16 %v227, %v226
  %v277 = vpack.c.b16 %v229, %v228
  %v278 = vpack.c.b16 %v231, %v230
  %v279 = vpack.c.b16 %v233, %v232
  %v280 = vpack.c.b16 %v235, %v234
  %v281 = vpack.c.b16 %v237, %v236
  %v282 = vpack.c.b16 %v239, %v238
  %v283 = vpack.c.b16 %v241, %v240
  %v284 = vpack.c.b16 %v243, %v242
  %v285 = vpack.c.b16 %v245, %v244
  %v286 = vpack.c.b16 %v247, %v246
  %v287 = vpack.c.b16 %v249, %v248
  %v288 = vpack.c.b16 %v251, %v250
  %v289 = vpack.c.b16 %v253, %v252
  %v290 = vpack.c.b16 %v255, %v254
  %v291 = vpack.c.b16 %v257, %v256
  %v292 = vpack.c.b16 %v259, %v258
  %v293 = vpack.c.b16 %v261, %v260
  %326 = vmatprep.subr.bf16.mxu0 0
  %327 = vmatpush1.bf16.msra.mxu0 %v269
  %328 = vmatprep.subr.bf16.mxu0 0
  %329 = vmatpush1.bf16.msra.mxu0 %v268
  %330 = vmatprep.subr.bf16.mxu0 0
  %331 = vmatpush1.bf16.msra.mxu0 %v267
  %332 = vmatprep.subr.bf16.mxu0 0
  %333 = vmatpush1.bf16.msra.mxu0 %v266
  %334 = vmatprep.subr.bf16.mxu0 0
  %335 = vmatpush1.bf16.msra.mxu0 %v265
  %336 = vmatprep.subr.bf16.mxu0 0
  %337 = vmatpush1.bf16.msra.mxu0 %v264
  %338 = vmatprep.subr.bf16.mxu0 0
  %339 = vmatpush1.bf16.msra.mxu0 %v263
  %340 = vmatprep.subr.bf16.mxu0 0
  %341 = vmatpush1.bf16.msra.mxu0 %v262
  %342 = vmatprep.subr.bf16.mxu0 0
  %343 = vmatpush2.bf16.msra.mxu0 %v277
  %344 = vmatprep.subr.bf16.mxu0 0
  %345 = vmatpush2.bf16.msra.mxu0 %v276
  %346 = vmatprep.subr.bf16.mxu0 0
  %347 = vmatpush2.bf16.msra.mxu0 %v275
  %348 = vmatprep.subr.bf16.mxu0 0
  %349 = vmatpush2.bf16.msra.mxu0 %v274
  %350 = vmatprep.subr.bf16.mxu0 0
  %351 = vmatpush2.bf16.msra.mxu0 %v273
  %352 = vmatprep.subr.bf16.mxu0 0
  %353 = vmatpush2.bf16.msra.mxu0 %v272
  %354 = vmatprep.subr.bf16.mxu0 0
  %355 = vmatpush2.bf16.msra.mxu0 %v271
  %356 = vmatprep.subr.bf16.mxu0 0
  %357 = vmatpush2.bf16.msra.mxu0 %v270
  %358 = vmatprep.mubr.bf16.mxu0 %v119
  %359 = vmatmul.mubr.bf16.gmra.mxu0 %v118
  %v360 = vpop.f32.mrf.mxu0
  %v361 = vadd.f32 %v92, %v360
  %v362 = vpop.f32.mrf.mxu0
  %v363 = vpop.f32.mrf.mxu0
  %v364 = vadd.f32 %v92, %v363
  %v365 = vpop.f32.mrf.mxu0
  %366 = vmatprep.mubr.bf16.mxu0 %v123
  %367 = vmatmul.mubr.bf16.gmra.mxu0 %v122
  %v368 = vpop.f32.mrf.mxu0
  %v369 = vadd.f32 %v92, %v368
  %v370 = vpop.f32.mrf.mxu0
  %v371 = vpop.f32.mrf.mxu0
  %v372 = vadd.f32 %v92, %v371
  %v373 = vpop.f32.mrf.mxu0
  %374 = vdwg.mxu0
  %375 = vmatprep.subr.bf16.mxu0 0
  %376 = vmatpush1.bf16.msra.mxu0 %v285
  %377 = vmatprep.subr.bf16.mxu0 0
  %378 = vmatpush1.bf16.msra.mxu0 %v284
  %379 = vmatprep.subr.bf16.mxu0 0
  %380 = vmatpush1.bf16.msra.mxu0 %v283
  %381 = vmatprep.subr.bf16.mxu0 0
  %382 = vmatpush1.bf16.msra.mxu0 %v282
  %383 = vmatprep.subr.bf16.mxu0 0
  %384 = vmatpush1.bf16.msra.mxu0 %v281
  %385 = vmatprep.subr.bf16.mxu0 0
  %386 = vmatpush1.bf16.msra.mxu0 %v280
  %387 = vmatprep.subr.bf16.mxu0 0
  %388 = vmatpush1.bf16.msra.mxu0 %v279
  %389 = vmatprep.subr.bf16.mxu0 0
  %390 = vmatpush1.bf16.msra.mxu0 %v278
  %391 = vmatprep.subr.bf16.mxu0 0
  %392 = vmatpush2.bf16.msra.mxu0 %v293
  %393 = vmatprep.subr.bf16.mxu0 0
  %394 = vmatpush2.bf16.msra.mxu0 %v292
  %395 = vmatprep.subr.bf16.mxu0 0
  %396 = vmatpush2.bf16.msra.mxu0 %v291
  %397 = vmatprep.subr.bf16.mxu0 0
  %398 = vmatpush2.bf16.msra.mxu0 %v290
  %399 = vmatprep.subr.bf16.mxu0 0
  %400 = vmatpush2.bf16.msra.mxu0 %v289
  %401 = vmatprep.subr.bf16.mxu0 0
  %402 = vmatpush2.bf16.msra.mxu0 %v288
  %403 = vmatprep.subr.bf16.mxu0 0
  %404 = vmatpush2.bf16.msra.mxu0 %v287
  %405 = vmatprep.subr.bf16.mxu0 0
  %406 = vmatpush2.bf16.msra.mxu0 %v286
  %407 = vmatprep.mubr.bf16.mxu0 %v121
  %408 = vmatmul.mubr.bf16.gmra.mxu0 %v120
  %v409 = vpop.f32.mrf.mxu0
  %v410 = vadd.f32 %v361, %v409
  %v411 = vpop.f32.mrf.mxu0
  %v412 = vpop.f32.mrf.mxu0
  %v413 = vadd.f32 %v364, %v412
  %v414 = vpop.f32.mrf.mxu0
  %415 = vmatprep.mubr.bf16.mxu0 %v125
  %416 = vmatmul.mubr.bf16.gmra.mxu0 %v124
  %v417 = vpop.f32.mrf.mxu0
  %v418 = vadd.f32 %v369, %v417
  %v419 = vpop.f32.mrf.mxu0
  %v420 = vpop.f32.mrf.mxu0
  %v421 = vadd.f32 %v372, %v420
  %v422 = vpop.f32.mrf.mxu0
  %423 = vdwg.mxu0
  %v424 = vmax.f32 %v410, 0.0
  %v425 = vmax.f32 %v413, 0.0
  %v426 = vmax.f32 %v418, 0.0
  %v427 = vmax.f32 %v421, 0.0
  %v428 = vpack.c.bf16 %v425, %v424
  %v429 = vpack.c.bf16 %v427, %v426
  %v432 = vunpack.c.l.b16 %v428
  %v433 = vunpack.c.h.b16 %v428
  %v434 = vunpack.c.l.b16 %v429
  %v435 = vunpack.c.h.b16 %v429
  %v436 = vpack.c.b16 %v432, %v432
  %v437 = vpack.c.b16 %v433, %v433
  %v438 = vpack.c.b16 %v434, %v434
  %v439 = vpack.c.b16 %v435, %v435
  %vm444 = vcmask 519168
  %445 = vst.msk [vmem:[%s3] sm:$0xf] %vm444, %v436
  %446 = vst.msk [vmem:[%s3 + $0x4] sm:$0xf] %vm444, %v437
  %447 = vst.msk [vmem:[%s3 + $0x8] sm:$0xf] %vm444, %v438
  %448 = vst.msk [vmem:[%s3 + $0xc] sm:$0xf] %vm444, %v439
  // Predicated region
  $region14: #{dueling_dqn_forward.6} parent=0 // pred_check
    _
  $region15: #{dueling_dqn_forward.6} parent=0 // pred_check_branch
    %450 = sbr.rel (0) target = $region17
  $region16: #{dueling_dqn_forward.6} parent=0 // pred_region
    _
  $region17: #{dueling_dqn_forward.6} parent=0 // pred_fallthru
    _
  // Predicated region
  $region18: #{dueling_dqn_forward.6} parent=0 // pred_check
    _
  $region19: #{dueling_dqn_forward.6} parent=0 // pred_check_branch
    %452 = sbr.rel (0) target = $region21
  $region20: #{dueling_dqn_forward.6} parent=0 // pred_region
    _
  $region21: #{dueling_dqn_forward.6} parent=0 // pred_fallthru
    _

// kernel: dueling_dqn_forward.9
$region0: #{dueling_dqn_forward.9}
  #allocation0 [shape = 'u32[]', space=smem, size = 0x4, offset = 0x4, fixed_abs, tag = 'smem constant byte address 0x4 - core index']
  #allocation1 [shape = 'u32[144,128]{1,0:T(1,128)}', space=vmem, size = 0x12000, scoped, tag = 'internal scratch']
  %s0 = inlined_call_operand.vmem [shape: f32[2,128], index: 0, kind: input, shape index: {}]
  %s1 = inlined_call_operand.hbm [shape: f32[2,6], index: 1, kind: output, shape index: {}]
  %s2 = sld [smem:[#allocation0]]
  $region14: #{dueling_dqn_forward.9} parent=0
    _
  %s4 = ssub.s32 1, %s2
  %s5 = scalar_select 0, %s4, %s2
  $region1: #{dueling_dqn_forward.9} parent=0
    #allocation2 [shape = 'u8[1024]{0}', space=vmem, size = 0x400, scoped, tag = 'output window, operand 0, single buffered']
    #allocation3 [shape = 's32[1]{0}', space=sflag, size = 0x4, scoped, tag = 'scoped memory for dueling_dqn_forward.9']
    %6 = vsyncpa [#allocation3], 0
    // Predicated region
    $region2: #{dueling_dqn_forward.9} parent=1 // pred_check
      _
    $region3: #{dueling_dqn_forward.9} parent=1 // pred_check_branch
      %8 = sbr.rel (0) target = $region5
    $region4: #{dueling_dqn_forward.9} parent=1 // pred_region
      _
    $region5: #{dueling_dqn_forward.9} parent=1 // pred_fallthru
      _
    %v9 = vld [vmem:[%s0] sm:$0x3]
    %11 = vset.pattern.permute.xlu0 6
    %12 = vperm.xlu0 %11, %v9
    %v13 = vpop.permute.xlu0 %12
    %v15 = vadd.f32 %v13, %v9
    %vm16 = vcmask 41984
    %v17 = vsel %vm16, %v9, 0.0
    %18 = vadd.xlane.f32.xlu0 %v17
    %v19 = vpop.xlane.xlu0 %18
    %v20 = vrot.slane %v19, 4
    %v21 = vadd.f32 %v19, %v20
    %v22 = vrot.slane %v21, 2
    %v23 = vadd.f32 %v21, %v22
    %v24 = vrot.slane %v23, 1
    %v25 = vadd.f32 %v23, %v24
    %s26 = vtos %v25
    %v27 = vrcp.pop 12.0
    %s28 = vtos %v27
    %s29 = smul.f32 %s26, %s28
    %v30 = vstv %s29
    %v31 = vsub.f32 %v15, %v30
    %32 = vst.msk [vmem:[#allocation2] sm:$0x3] %vm16, %v31
    // Predicated region
    $region6: #{dueling_dqn_forward.9} parent=1 // pred_check
      _
    $region7: #{dueling_dqn_forward.9} parent=1 // pred_check_branch
      %34 = sbr.rel (0) target = $region9
    $region8: #{dueling_dqn_forward.9} parent=1 // pred_region
      %s36 = ssub.s32 32, 32
      %37 = vsyncadd [#allocation3], %s36
      %s39 = sshll.u32 [#allocation2], 4
      %s40 = int_to_ptr.vmem [resolvable:$true] %s39
      %42 = dma.vmem_to_hbm [thread:$0]  %s40, 32, %s1, [#allocation3]
    $region9: #{dueling_dqn_forward.9} parent=1 // pred_fallthru
      _
    // Predicated region
    $region10: #{dueling_dqn_forward.9} parent=1 // pred_check
      _
    $region11: #{dueling_dqn_forward.9} parent=1 // pred_check_branch
      %44 = sbr.rel (0) target = $region13
    $region12: #{dueling_dqn_forward.9} parent=1 // pred_region
      %45 = dma.done [#allocation3], 32
    $region13: #{dueling_dqn_forward.9} parent=1 // pred_fallthru
      _
    %46 = vsyncpa [#allocation3], 1

// kernel: dueling_dqn_forward.7
$region0: #{dueling_dqn_forward.7}
  #allocation0 [shape = 'u32[]', space=smem, size = 0x4, offset = 0x4, fixed_abs, tag = 'smem constant byte address 0x4 - core index']
  #allocation1 [shape = 'u32[144,128]{1,0:T(1,128)}', space=vmem, size = 0x12000, scoped, tag = 'internal scratch']
  %s0 = inlined_call_operand.vmem [shape: bf16[8,576], index: 0, kind: input, shape index: {}]
  %s1 = inlined_call_operand.vmem [shape: bf16[576,64], index: 1, kind: input, shape index: {}]
  %s2 = inlined_call_operand.vmem [shape: f32[1,64], index: 2, kind: input, shape index: {}]
  %s3 = inlined_call_operand.vmem [shape: bf16[8,64], index: 3, kind: output, shape index: {}]
  %s4 = sld [smem:[#allocation0]]
  $region22: #{dueling_dqn_forward.7} parent=0
    _
  %s6 = ssub.s32 1, %s4
  %s7 = scalar_select 0, %s6, %s4
  // Predicated region
  $region2: #{dueling_dqn_forward.7} parent=0 // pred_check
    _
  $region3: #{dueling_dqn_forward.7} parent=0 // pred_check_branch
    %9 = sbr.rel (0) target = $region5
  $region4: #{dueling_dqn_forward.7} parent=0 // pred_region
    _
  $region5: #{dueling_dqn_forward.7} parent=0 // pred_fallthru
    _
  // Predicated region
  $region6: #{dueling_dqn_forward.7} parent=0 // pred_check
    _
  $region7: #{dueling_dqn_forward.7} parent=0 // pred_check_branch
    %11 = sbr.rel (0) target = $region9
  $region8: #{dueling_dqn_forward.7} parent=0 // pred_region
    _
  $region9: #{dueling_dqn_forward.7} parent=0 // pred_fallthru
    _
  // Predicated region
  $region10: #{dueling_dqn_forward.7} parent=0 // pred_check
    _
  $region11: #{dueling_dqn_forward.7} parent=0 // pred_check_branch
    %13 = sbr.rel (0) target = $region13
  $region12: #{dueling_dqn_forward.7} parent=0 // pred_region
    _
  $region13: #{dueling_dqn_forward.7} parent=0 // pred_fallthru
    _
  %v15 = vld [vmem:[%s0] sm:$0xff]
  %v16 = vld [vmem:[%s0 + $0x8] sm:$0xff]
  %v17 = vld [vmem:[%s0 + $0x10] sm:$0xf]
  %v18 = vld [vmem:[%s1] sm:$0xf]
  %v19 = vld [vmem:[%s1 + $0x4] sm:$0xf]
  %v20 = vld [vmem:[%s1 + $0x8] sm:$0xf]
  %v21 = vld [vmem:[%s1 + $0xc] sm:$0xf]
  %v22 = vld [vmem:[%s1 + $0x10] sm:$0xf]
  %v23 = vld [vmem:[%s1 + $0x14] sm:$0xf]
  %v24 = vld [vmem:[%s1 + $0x18] sm:$0xf]
  %v25 = vld [vmem:[%s1 + $0x1c] sm:$0xf]
  %v26 = vld [vmem:[%s1 + $0x20] sm:$0xf]
  %v27 = vld [vmem:[%s1 + $0x24] sm:$0xf]
  %v28 = vld [vmem:[%s1 + $0x28] sm:$0xf]
  %v29 = vld [vmem:[%s1 + $0x2c] sm:$0xf]
  %v30 = vld [vmem:[%s1 + $0x30] sm:$0xf]
  %v31 = vld [vmem:[%s1 + $0x34] sm:$0xf]
  %v32 = vld [vmem:[%s1 + $0x38] sm:$0xf]
  %v33 = vld [vmem:[%s1 + $0x3c] sm:$0xf]
  %v34 = vld [vmem:[%s1 + $0x40] sm:$0xf]
  %v35 = vld [vmem:[%s1 + $0x44] sm:$0xf]
  %v36 = vld [vmem:[%s1 + $0x48] sm:$0xf]
  %v37 = vld [vmem:[%s1 + $0x4c] sm:$0xf]
  %v38 = vld [vmem:[%s1 + $0x50] sm:$0xf]
  %v39 = vld [vmem:[%s1 + $0x54] sm:$0xf]
  %v40 = vld [vmem:[%s1 + $0x58] sm:$0xf]
  %v41 = vld [vmem:[%s1 + $0x5c] sm:$0xf]
  %v42 = vld [vmem:[%s1 + $0x60] sm:$0xf]
  %v43 = vld [vmem:[%s1 + $0x64] sm:$0xf]
  %v44 = vld [vmem:[%s1 + $0x68] sm:$0xf]
  %v45 = vld [vmem:[%s1 + $0x6c] sm:$0xf]
  %v46 = vld [vmem:[%s1 + $0x70] sm:$0xf]
  %v47 = vld [vmem:[%s1 + $0x74] sm:$0xf]
  %v48 = vld [vmem:[%s1 + $0x78] sm:$0xf]
  %v49 = vld [vmem:[%s1 + $0x7c] sm:$0xf]
  %v50 = vld [vmem:[%s1 + $0x80] sm:$0xf]
  %v51 = vld [vmem:[%s1 + $0x84] sm:$0xf]
  %v52 = vld [vmem:[%s1 + $0x88] sm:$0xf]
  %v53 = vld [vmem:[%s1 + $0x8c] sm:$0xf]
  %v54 = vld [vmem:[%s1 + $0x90] sm:$0xf]
  %v55 = vld [vmem:[%s1 + $0x94] sm:$0xf]
  %v56 = vld [vmem:[%s1 + $0x98] sm:$0xf]
  %v57 = vld [vmem:[%s1 + $0x9c] sm:$0xf]
  %v58 = vld [vmem:[%s1 + $0xa0] sm:$0xf]
  %v59 = vld [vmem:[%s1 + $0xa4] sm:$0xf]
  %v60 = vld [vmem:[%s1 + $0xa8] sm:$0xf]
  %v61 = vld [vmem:[%s1 + $0xac] sm:$0xf]
  %v62 = vld [vmem:[%s1 + $0xb0] sm:$0xf]
  %v63 = vld [vmem:[%s1 + $0xb4] sm:$0xf]
  %v64 = vld [vmem:[%s1 + $0xb8] sm:$0xf]
  %v65 = vld [vmem:[%s1 + $0xbc] sm:$0xf]
  %v66 = vld [vmem:[%s1 + $0xc0] sm:$0xf]
  %v67 = vld [vmem:[%s1 + $0xc4] sm:$0xf]
  %v68 = vld [vmem:[%s1 + $0xc8] sm:$0xf]
  %v69 = vld [vmem:[%s1 + $0xcc] sm:$0xf]
  %v70 = vld [vmem:[%s1 + $0xd0] sm:$0xf]
  %v71 = vld [vmem:[%s1 + $0xd4] sm:$0xf]
  %v72 = vld [vmem:[%s1 + $0xd8] sm:$0xf]
  %v73 = vld [vmem:[%s1 + $0xdc] sm:$0xf]
  %v74 = vld [vmem:[%s1 + $0xe0] sm:$0xf]
  %v75 = vld [vmem:[%s1 + $0xe4] sm:$0xf]
  %v76 = vld [vmem:[%s1 + $0xe8] sm:$0xf]
  %v77 = vld [vmem:[%s1 + $0xec] sm:$0xf]
  %v78 = vld [vmem:[%s1 + $0xf0] sm:$0xf]
  %v79 = vld [vmem:[%s1 + $0xf4] sm:$0xf]
  %v80 = vld [vmem:[%s1 + $0xf8] sm:$0xf]
  %v81 = vld [vmem:[%s1 + $0xfc] sm:$0xf]
  %v82 = vld [vmem:[%s1 + $0x100] sm:$0xf]
  %v83 = vld [vmem:[%s1 + $0x104] sm:$0xf]
  %v84 = vld [vmem:[%s1 + $0x108] sm:$0xf]
  %v85 = vld [vmem:[%s1 + $0x10c] sm:$0xf]
  %v86 = vld [vmem:[%s1 + $0x110] sm:$0xf]
  %v87 = vld [vmem:[%s1 + $0x114] sm:$0xf]
  %v88 = vld [vmem:[%s1 + $0x118] sm:$0xf]
  %v89 = vld [vmem:[%s1 + $0x11c] sm:$0xf]
  %v90 = vld [vmem:[%s2] sm:$0x1]
  %v92 = vlaneseq
  %v93 = vshrl.u32 %v92, 7
  %v94 = vsub.s32 0, %v93
  %v95 = vrot.slane %v90, %v94
  %v100 = vunpack.c.l.b16 %v15
  %v101 = vunpack.c.h.b16 %v15
  %v102 = vunpack.c.l.b16 %v16
  %v103 = vunpack.c.h.b16 %v16
  %v104 = vunpack.c.l.b16 %v17
  %v105 = vpack.c.b16 %v100, %v100
  %v106 = vpack.c.b16 %v101, %v101
  %v107 = vpack.c.b16 %v102, %v102
  %v108 = vpack.c.b16 %v103, %v103
  %v109 = vpack.c.b16 %v104, %v104
  %v186 = vunpack.c.l.b16 %v18
  %v187 = vunpack.c.l.b16 %v19
  %v188 = vunpack.c.l.b16 %v20
  %v189 = vunpack.c.l.b16 %v21
  %v190 = vunpack.c.l.b16 %v22
  %v191 = vunpack.c.l.b16 %v23
  %v192 = vunpack.c.l.b16 %v24
  %v193 = vunpack.c.l.b16 %v25
  %v194 = vunpack.c.l.b16 %v26
  %v195 = vunpack.c.l.b16 %v27
  %v196 = vunpack.c.l.b16 %v28
  %v197 = vunpack.c.l.b16 %v29
  %v198 = vunpack.c.l.b16 %v30
  %v199 = vunpack.c.l.b16 %v31
  %v200 = vunpack.c.l.b16 %v32
  %v201 = vunpack.c.l.b16 %v33
  %v202 = vunpack.c.l.b16 %v34
  %v203 = vunpack.c.l.b16 %v35
  %v204 = vunpack.c.l.b16 %v36
  %v205 = vunpack.c.l.b16 %v37
  %v206 = vunpack.c.l.b16 %v38
  %v207 = vunpack.c.l.b16 %v39
  %v208 = vunpack.c.l.b16 %v40
  %v209 = vunpack.c.l.b16 %v41
  %v210 = vunpack.c.l.b16 %v42
  %v211 = vunpack.c.l.b16 %v43
  %v212 = vunpack.c.l.b16 %v44
  %v213 = vunpack.c.l.b16 %v45
  %v214 = vunpack.c.l.b16 %v46
  %v215 = vunpack.c.l.b16 %v47
  %v216 = vunpack.c.l.b16 %v48
  %v217 = vunpack.c.l.b16 %v49
  %v218 = vunpack.c.l.b16 %v50
  %v219 = vunpack.c.l.b16 %v51
  %v220 = vunpack.c.l.b16 %v52
  %v221 = vunpack.c.l.b16 %v53
  %v222 = vunpack.c.l.b16 %v54
  %v223 = vunpack.c.l.b16 %v55
  %v224 = vunpack.c.l.b16 %v56
  %v225 = vunpack.c.l.b16 %v57
  %v226 = vunpack.c.l.b16 %v58
  %v227 = vunpack.c.l.b16 %v59
  %v228 = vunpack.c.l.b16 %v60
  %v229 = vunpack.c.l.b16 %v61
  %v230 = vunpack.c.l.b16 %v62
  %v231 = vunpack.c.l.b16 %v63
  %v232 = vunpack.c.l.b16 %v64
  %v233 = vunpack.c.l.b16 %v65
  %v234 = vunpack.c.l.b16 %v66
  %v235 = vunpack.c.l.b16 %v67
  %v236 = vunpack.c.l.b16 %v68
  %v237 = vunpack.c.l.b16 %v69
  %v238 = vunpack.c.l.b16 %v70
  %v239 = vunpack.c.l.b16 %v71
  %v240 = vunpack.c.l.b16 %v72
  %v241 = vunpack.c.l.b16 %v73
  %v242 = vunpack.c.l.b16 %v74
  %v243 = vunpack.c.l.b16 %v75
  %v244 = vunpack.c.l.b16 %v76
  %v245 = vunpack.c.l.b16 %v77
  %v246 = vunpack.c.l.b16 %v78
  %v247 = vunpack.c.l.b16 %v79
  %v248 = vunpack.c.l.b16 %v80
  %v249 = vunpack.c.l.b16 %v81
  %v250 = vunpack.c.l.b16 %v82
  %v251 = vunpack.c.l.b16 %v83
  %v252 = vunpack.c.l.b16 %v84
  %v253 = vunpack.c.l.b16 %v85
  %v254 = vunpack.c.l.b16 %v86
  %v255 = vunpack.c.l.b16 %v87
  %v256 = vunpack.c.l.b16 %v88
  %v257 = vunpack.c.l.b16 %v89
  %v258 = vpack.c.b16 %v187, %v186
  %v259 = vpack.c.b16 %v189, %v188
  %v260 = vpack.c.b16 %v191, %v190
  %v261 = vpack.c.b16 %v193, %v192
  %v262 = vpack.c.b16 %v195, %v194
  %v263 = vpack.c.b16 %v197, %v196
  %v264 = vpack.c.b16 %v199, %v198
  %v265 = vpack.c.b16 %v201, %v200
  %v266 = vpack.c.b16 %v203, %v202
  %v267 = vpack.c.b16 %v205, %v204
  %v268 = vpack.c.b16 %v207, %v206
  %v269 = vpack.c.b16 %v209, %v208
  %v270 = vpack.c.b16 %v211, %v210
  %v271 = vpack.c.b16 %v213, %v212
  %v272 = vpack.c.b16 %v215, %v214
  %v273 = vpack.c.b16 %v217, %v216
  %v274 = vpack.c.b16 %v219, %v218
  %v275 = vpack.c.b16 %v221, %v220
  %v276 = vpack.c.b16 %v223, %v222
  %v277 = vpack.c.b16 %v225, %v224
  %v278 = vpack.c.b16 %v227, %v226
  %v279 = vpack.c.b16 %v229, %v228
  %v280 = vpack.c.b16 %v231, %v230
  %v281 = vpack.c.b16 %v233, %v232
  %v282 = vpack.c.b16 %v235, %v234
  %v283 = vpack.c.b16 %v237, %v236
  %v284 = vpack.c.b16 %v239, %v238
  %v285 = vpack.c.b16 %v241, %v240
  %v286 = vpack.c.b16 %v243, %v242
  %v287 = vpack.c.b16 %v245, %v244
  %v288 = vpack.c.b16 %v247, %v246
  %v289 = vpack.c.b16 %v249, %v248
  %v290 = vpack.c.b16 %v251, %v250
  %v291 = vpack.c.b16 %v253, %v252
  %v292 = vpack.c.b16 %v255, %v254
  %v293 = vpack.c.b16 %v257, %v256
  %vm330 = vcmask 523264
  %v332 = vsel %vm330, %v109, 0
  %334 = vmatprep.subr.bf16.mxu0 0
  %335 = vmatpush1.bf16.msra.mxu0 %v265
  %336 = vmatprep.subr.bf16.mxu0 0
  %337 = vmatpush1.bf16.msra.mxu0 %v264
  %338 = vmatprep.subr.bf16.mxu0 0
  %339 = vmatpush1.bf16.msra.mxu0 %v263
  %340 = vmatprep.subr.bf16.mxu0 0
  %341 = vmatpush1.bf16.msra.mxu0 %v262
  %342 = vmatprep.subr.bf16.mxu0 0
  %343 = vmatpush1.bf16.msra.mxu0 %v261
  %344 = vmatprep.subr.bf16.mxu0 0
  %345 = vmatpush1.bf16.msra.mxu0 %v260
  %346 = vmatprep.subr.bf16.mxu0 0
  %347 = vmatpush1.bf16.msra.mxu0 %v259
  %348 = vmatprep.subr.bf16.mxu0 0
  %349 = vmatpush1.bf16.msra.mxu0 %v258
  %350 = vmatprep.subr.bf16.mxu0 0
  %351 = vmatpush2.bf16.msra.mxu0 %v273
  %352 = vmatprep.subr.bf16.mxu0 0
  %353 = vmatpush2.bf16.msra.mxu0 %v272
  %354 = vmatprep.subr.bf16.mxu0 0
  %355 = vmatpush2.bf16.msra.mxu0 %v271
  %356 = vmatprep.subr.bf16.mxu0 0
  %357 = vmatpush2.bf16.msra.mxu0 %v270
  %358 = vmatprep.subr.bf16.mxu0 0
  %359 = vmatpush2.bf16.msra.mxu0 %v269
  %360 = vmatprep.subr.bf16.mxu0 0
  %361 = vmatpush2.bf16.msra.mxu0 %v268
  %362 = vmatprep.subr.bf16.mxu0 0
  %363 = vmatpush2.bf16.msra.mxu0 %v267
  %364 = vmatprep.subr.bf16.mxu0 0
  %365 = vmatpush2.bf16.msra.mxu0 %v266
  %366 = vmatprep.mubr.bf16.mxu0 %v106
  %367 = vmatmul.mubr.bf16.gmra.mxu0 %v105
  %v368 = vpop.f32.mrf.mxu0
  %v369 = vadd.f32 %v95, %v368
  %v370 = vpop.f32.mrf.mxu0
  %v371 = vpop.f32.mrf.mxu0
  %v372 = vpop.f32.mrf.mxu0
  %373 = vdwg.mxu0
  %374 = vmatprep.subr.bf16.mxu0 0
  %375 = vmatpush1.bf16.msra.mxu0 %v281
  %376 = vmatprep.subr.bf16.mxu0 0
  %377 = vmatpush1.bf16.msra.mxu0 %v280
  %378 = vmatprep.subr.bf16.mxu0 0
  %379 = vmatpush1.bf16.msra.mxu0 %v279
  %380 = vmatprep.subr.bf16.mxu0 0
  %381 = vmatpush1.bf16.msra.mxu0 %v278
  %382 = vmatprep.subr.bf16.mxu0 0
  %383 = vmatpush1.bf16.msra.mxu0 %v277
  %384 = vmatprep.subr.bf16.mxu0 0
  %385 = vmatpush1.bf16.msra.mxu0 %v276
  %386 = vmatprep.subr.bf16.mxu0 0
  %387 = vmatpush1.bf16.msra.mxu0 %v275
  %388 = vmatprep.subr.bf16.mxu0 0
  %389 = vmatpush1.bf16.msra.mxu0 %v274
  %390 = vmatprep.subr.bf16.mxu0 0
  %391 = vmatpush2.bf16.msra.mxu0 %v289
  %392 = vmatprep.subr.bf16.mxu0 0
  %393 = vmatpush2.bf16.msra.mxu0 %v288
  %394 = vmatprep.subr.bf16.mxu0 0
  %395 = vmatpush2.bf16.msra.mxu0 %v287
  %396 = vmatprep.subr.bf16.mxu0 0
  %397 = vmatpush2.bf16.msra.mxu0 %v286
  %398 = vmatprep.subr.bf16.mxu0 0
  %399 = vmatpush2.bf16.msra.mxu0 %v285
  %400 = vmatprep.subr.bf16.mxu0 0
  %401 = vmatpush2.bf16.msra.mxu0 %v284
  %402 = vmatprep.subr.bf16.mxu0 0
  %403 = vmatpush2.bf16.msra.mxu0 %v283
  %404 = vmatprep.subr.bf16.mxu0 0
  %405 = vmatpush2.bf16.msra.mxu0 %v282
  %406 = vmatprep.mubr.bf16.mxu0 %v108
  %407 = vmatmul.mubr.bf16.gmra.mxu0 %v107
  %v408 = vpop.f32.mrf.mxu0
  %v409 = vadd.f32 %v369, %v408
  %v410 = vpop.f32.mrf.mxu0
  %v411 = vpop.f32.mrf.mxu0
  %v412 = vpop.f32.mrf.mxu0
  %413 = vdwg.mxu0
  %414 = vmatprep.subr.bf16.mxu0 0
  %415 = vmatpush1.bf16.msra.mxu0 0
  %416 = vmatprep.subr.bf16.mxu0 0
  %417 = vmatpush1.bf16.msra.mxu0 0
  %418 = vmatprep.subr.bf16.mxu0 0
  %419 = vmatpush1.bf16.msra.mxu0 0
  %420 = vmatprep.subr.bf16.mxu0 0
  %421 = vmatpush1.bf16.msra.mxu0 0
  %422 = vmatprep.subr.bf16.mxu0 0
  %423 = vmatpush1.bf16.msra.mxu0 %v293
  %424 = vmatprep.subr.bf16.mxu0 0
  %425 = vmatpush1.bf16.msra.mxu0 %v292
  %426 = vmatprep.subr.bf16.mxu0 0
  %427 = vmatpush1.bf16.msra.mxu0 %v291
  %428 = vmatprep.subr.bf16.mxu0 0
  %429 = vmatpush1.bf16.msra.mxu0 %v290
  %430 = vmatprep.subr.bf16.mxu0 0
  %431 = vmatpush2.bf16.msra.mxu0 0
  %432 = vmatprep.subr.bf16.mxu0 0
  %433 = vmatpush2.bf16.msra.mxu0 0
  %434 = vmatprep.subr.bf16.mxu0 0
  %435 = vmatpush2.bf16.msra.mxu0 0
  %436 = vmatprep.subr.bf16.mxu0 0
  %437 = vmatpush2.bf16.msra.mxu0 0
  %438 = vmatprep.subr.bf16.mxu0 0
  %439 = vmatpush2.bf16.msra.mxu0 0
  %440 = vmatprep.subr.bf16.mxu0 0
  %441 = vmatpush2.bf16.msra.mxu0 0
  %442 = vmatprep.subr.bf16.mxu0 0
  %443 = vmatpush2.bf16.msra.mxu0 0
  %444 = vmatprep.subr.bf16.mxu0 0
  %445 = vmatpush2.bf16.msra.mxu0 0
  %446 = vmatprep.mubr.bf16.mxu0 0
  %447 = vmatmul.mubr.bf16.gmra.mxu0 %v332
  %v448 = vpop.f32.mrf.mxu0
  %v449 = vadd.f32 %v409, %v448
  %v450 = vpop.f32.mrf.mxu0
  %v451 = vpop.f32.mrf.mxu0
  %v452 = vpop.f32.mrf.mxu0
  %453 = vdwg.mxu0
  %v454 = vmax.f32 %v449, 0.0
  %v455 = vpack.c.bf16 %v454, %v454
  %vm456 = vcmask 519168
  %457 = vst.msk [vmem:[%s3] sm:$0xf] %vm456, %v455
  // Predicated region
  $region14: #{dueling_dqn_forward.7} parent=0 // pred_check
    _
  $region15: #{dueling_dqn_forward.7} parent=0 // pred_check_branch
    %459 = sbr.rel (0) target = $region17
  $region16: #{dueling_dqn_forward.7} parent=0 // pred_region
    _
  $region17: #{dueling_dqn_forward.7} parent=0 // pred_fallthru
    _
  // Predicated region
  $region18: #{dueling_dqn_forward.7} parent=0 // pred_check
    _
  $region19: #{dueling_dqn_forward.7} parent=0 // pred_check_branch
    %461 = sbr.rel (0) target = $region21
  $region20: #{dueling_dqn_forward.7} parent=0 // pred_region
    _
  $region21: #{dueling_dqn_forward.7} parent=0 // pred_fallthru
    _

// kernel: dueling_dqn_forward.8
$region0: #{dueling_dqn_forward.8}
  #allocation0 [shape = 'u32[]', space=smem, size = 0x4, offset = 0x4, fixed_abs, tag = 'smem constant byte address 0x4 - core index']
  #allocation1 [shape = 'u32[144,128]{1,0:T(1,128)}', space=vmem, size = 0x12000, scoped, tag = 'internal scratch']
  %s0 = inlined_call_operand.vmem [shape: bf16[2,256], index: 0, kind: input, shape index: {}]
  %s1 = inlined_call_operand.vmem [shape: bf16[256,1024], index: 1, kind: input, shape index: {}]
  %s2 = inlined_call_operand.vmem [shape: f32[1,1024], index: 2, kind: input, shape index: {}]
  %s3 = inlined_call_operand.vmem [shape: bf16[1024,128], index: 3, kind: input, shape index: {}]
  %s4 = inlined_call_operand.vmem [shape: f32[1,128], index: 4, kind: input, shape index: {}]
  %s5 = inlined_call_operand.vmem [shape: f32[2,128], index: 5, kind: output, shape index: {}]
  %s6 = sld [smem:[#allocation0]]
  $region30: #{dueling_dqn_forward.8} parent=0
    _
  %s8 = ssub.s32 1, %s6
  %s9 = scalar_select 0, %s8, %s6
  // Predicated region
  $region2: #{dueling_dqn_forward.8} parent=0 // pred_check
    _
  $region3: #{dueling_dqn_forward.8} parent=0 // pred_check_branch
    %11 = sbr.rel (0) target = $region5
  $region4: #{dueling_dqn_forward.8} parent=0 // pred_region
    _
  $region5: #{dueling_dqn_forward.8} parent=0 // pred_fallthru
    _
  // Predicated region
  $region6: #{dueling_dqn_forward.8} parent=0 // pred_check
    _
  $region7: #{dueling_dqn_forward.8} parent=0 // pred_check_branch
    %13 = sbr.rel (0) target = $region9
  $region8: #{dueling_dqn_forward.8} parent=0 // pred_region
    _
  $region9: #{dueling_dqn_forward.8} parent=0 // pred_fallthru
    _
  // Predicated region
  $region10: #{dueling_dqn_forward.8} parent=0 // pred_check
    _
  $region11: #{dueling_dqn_forward.8} parent=0 // pred_check_branch
    %15 = sbr.rel (0) target = $region13
  $region12: #{dueling_dqn_forward.8} parent=0 // pred_region
    _
  $region13: #{dueling_dqn_forward.8} parent=0 // pred_fallthru
    _
  // Predicated region
  $region14: #{dueling_dqn_forward.8} parent=0 // pred_check
    _
  $region15: #{dueling_dqn_forward.8} parent=0 // pred_check_branch
    %17 = sbr.rel (0) target = $region17
  $region16: #{dueling_dqn_forward.8} parent=0 // pred_region
    _
  $region17: #{dueling_dqn_forward.8} parent=0 // pred_fallthru
    _
  // Predicated region
  $region18: #{dueling_dqn_forward.8} parent=0 // pred_check
    _
  $region19: #{dueling_dqn_forward.8} parent=0 // pred_check_branch
    %19 = sbr.rel (0) target = $region21
  $region20: #{dueling_dqn_forward.8} parent=0 // pred_region
    _
  $region21: #{dueling_dqn_forward.8} parent=0 // pred_fallthru
    _
  %v21 = vld [vmem:[%s0] sm:$0x3]
  %v22 = vld [vmem:[%s1] sm:$0xff]
  %v23 = vld [vmem:[%s1 + $0x8] sm:$0xff]
  %v24 = vld [vmem:[%s1 + $0x10] sm:$0xff]
  %v25 = vld [vmem:[%s1 + $0x18] sm:$0xff]
  %v26 = vld [vmem:[%s1 + $0x20] sm:$0xff]
  %v27 = vld [vmem:[%s1 + $0x28] sm:$0xff]
  %v28 = vld [vmem:[%s1 + $0x30] sm:$0xff]
  %v29 = vld [vmem:[%s1 + $0x38] sm:$0xff]
  %v30 = vld [vmem:[%s1 + $0x40] sm:$0xff]
  %v31 = vld [vmem:[%s1 + $0x48] sm:$0xff]
  %v32 = vld [vmem:[%s1 + $0x50] sm:$0xff]
  %v33 = vld [vmem:[%s1 + $0x58] sm:$0xff]
  %v34 = vld [vmem:[%s1 + $0x60] sm:$0xff]
  %v35 = vld [vmem:[%s1 + $0x68] sm:$0xff]
  %v36 = vld [vmem:[%s1 + $0x70] sm:$0xff]
  %v37 = vld [vmem:[%s1 + $0x78] sm:$0xff]
  %v38 = vld [vmem:[%s1 + $0x80] sm:$0xff]
  %v39 = vld [vmem:[%s1 + $0x88] sm:$0xff]
  %v40 = vld [vmem:[%s1 + $0x90] sm:$0xff]
  %v41 = vld [vmem:[%s1 + $0x98] sm:$0xff]
  %v42 = vld [vmem:[%s1 + $0xa0] sm:$0xff]
  %v43 = vld [vmem:[%s1 + $0xa8] sm:$0xff]
  %v44 = vld [vmem:[%s1 + $0xb0] sm:$0xff]
  %v45 = vld [vmem:[%s1 + $0xb8] sm:$0xff]
  %v46 = vld [vmem:[%s1 + $0xc0] sm:$0xff]
  %v47 = vld [vmem:[%s1 + $0xc8] sm:$0xff]
  %v48 = vld [vmem:[%s1 + $0xd0] sm:$0xff]
  %v49 = vld [vmem:[%s1 + $0xd8] sm:$0xff]
  %v50 = vld [vmem:[%s1 + $0xe0] sm:$0xff]
  %v51 = vld [vmem:[%s1 + $0xe8] sm:$0xff]
  %v52 = vld [vmem:[%s1 + $0xf0] sm:$0xff]
  %v53 = vld [vmem:[%s1 + $0xf8] sm:$0xff]
  %v54 = vld [vmem:[%s1 + $0x100] sm:$0xff]
  %v55 = vld [vmem:[%s1 + $0x108] sm:$0xff]
  %v56 = vld [vmem:[%s1 + $0x110] sm:$0xff]
  %v57 = vld [vmem:[%s1 + $0x118] sm:$0xff]
  %v58 = vld [vmem:[%s1 + $0x120] sm:$0xff]
  %v59 = vld [vmem:[%s1 + $0x128] sm:$0xff]
  %v60 = vld [vmem:[%s1 + $0x130] sm:$0xff]
  %v61 = vld [vmem:[%s1 + $0x138] sm:$0xff]
  %v62 = vld [vmem:[%s1 + $0x140] sm:$0xff]
  %v63 = vld [vmem:[%s1 + $0x148] sm:$0xff]
  %v64 = vld [vmem:[%s1 + $0x150] sm:$0xff]
  %v65 = vld [vmem:[%s1 + $0x158] sm:$0xff]
  %v66 = vld [vmem:[%s1 + $0x160] sm:$0xff]
  %v67 = vld [vmem:[%s1 + $0x168] sm:$0xff]
  %v68 = vld [vmem:[%s1 + $0x170] sm:$0xff]
  %v69 = vld [vmem:[%s1 + $0x178] sm:$0xff]
  %v70 = vld [vmem:[%s1 + $0x180] sm:$0xff]
  %v71 = vld [vmem:[%s1 + $0x188] sm:$0xff]
  %v72 = vld [vmem:[%s1 + $0x190] sm:$0xff]
  %v73 = vld [vmem:[%s1 + $0x198] sm:$0xff]
  %v74 = vld [vmem:[%s1 + $0x1a0] sm:$0xff]
  %v75 = vld [vmem:[%s1 + $0x1a8] sm:$0xff]
  %v76 = vld [vmem:[%s1 + $0x1b0] sm:$0xff]
  %v77 = vld [vmem:[%s1 + $0x1b8] sm:$0xff]
  %v78 = vld [vmem:[%s1 + $0x1c0] sm:$0xff]
  %v79 = vld [vmem:[%s1 + $0x1c8] sm:$0xff]
  %v80 = vld [vmem:[%s1 + $0x1d0] sm:$0xff]
  %v81 = vld [vmem:[%s1 + $0x1d8] sm:$0xff]
  %v82 = vld [vmem:[%s1 + $0x1e0] sm:$0xff]
  %v83 = vld [vmem:[%s1 + $0x1e8] sm:$0xff]
  %v84 = vld [vmem:[%s1 + $0x1f0] sm:$0xff]
  %v85 = vld [vmem:[%s1 + $0x1f8] sm:$0xff]
  %v86 = vld [vmem:[%s1 + $0x200] sm:$0xff]
  %v87 = vld [vmem:[%s1 + $0x208] sm:$0xff]
  %v88 = vld [vmem:[%s1 + $0x210] sm:$0xff]
  %v89 = vld [vmem:[%s1 + $0x218] sm:$0xff]
  %v90 = vld [vmem:[%s1 + $0x220] sm:$0xff]
  %v91 = vld [vmem:[%s1 + $0x228] sm:$0xff]
  %v92 = vld [vmem:[%s1 + $0x230] sm:$0xff]
  %v93 = vld [vmem:[%s1 + $0x238] sm:$0xff]
  %v94 = vld [vmem:[%s1 + $0x240] sm:$0xff]
  %v95 = vld [vmem:[%s1 + $0x248] sm:$0xff]
  %v96 = vld [vmem:[%s1 + $0x250] sm:$0xff]
  %v97 = vld [vmem:[%s1 + $0x258] sm:$0xff]
  %v98 = vld [vmem:[%s1 + $0x260] sm:$0xff]
  %v99 = vld [vmem:[%s1 + $0x268] sm:$0xff]
  %v100 = vld [vmem:[%s1 + $0x270] sm:$0xff]
  %v101 = vld [vmem:[%s1 + $0x278] sm:$0xff]
  %v102 = vld [vmem:[%s1 + $0x280] sm:$0xff]
  %v103 = vld [vmem:[%s1 + $0x288] sm:$0xff]
  %v104 = vld [vmem:[%s1 + $0x290] sm:$0xff]
  %v105 = vld [vmem:[%s1 + $0x298] sm:$0xff]
  %v106 = vld [vmem:[%s1 + $0x2a0] sm:$0xff]
  %v107 = vld [vmem:[%s1 + $0x2a8] sm:$0xff]
  %v108 = vld [vmem:[%s1 + $0x2b0] sm:$0xff]
  %v109 = vld [vmem:[%s1 + $0x2b8] sm:$0xff]
  %v110 = vld [vmem:[%s1 + $0x2c0] sm:$0xff]
  %v111 = vld [vmem:[%s1 + $0x2c8] sm:$0xff]
  %v112 = vld [vmem:[%s1 + $0x2d0] sm:$0xff]
  %v113 = vld [vmem:[%s1 + $0x2d8] sm:$0xff]
  %v114 = vld [vmem:[%s1 + $0x2e0] sm:$0xff]
  %v115 = vld [vmem:[%s1 + $0x2e8] sm:$0xff]
  %v116 = vld [vmem:[%s1 + $0x2f0] sm:$0xff]
  %v117 = vld [vmem:[%s1 + $0x2f8] sm:$0xff]
  %v118 = vld [vmem:[%s1 + $0x300] sm:$0xff]
  %v119 = vld [vmem:[%s1 + $0x308] sm:$0xff]
  %v120 = vld [vmem:[%s1 + $0x310] sm:$0xff]
  %v121 = vld [vmem:[%s1 + $0x318] sm:$0xff]
  %v122 = vld [vmem:[%s1 + $0x320] sm:$0xff]
  %v123 = vld [vmem:[%s1 + $0x328] sm:$0xff]
  %v124 = vld [vmem:[%s1 + $0x330] sm:$0xff]
  %v125 = vld [vmem:[%s1 + $0x338] sm:$0xff]
  %v126 = vld [vmem:[%s1 + $0x340] sm:$0xff]
  %v127 = vld [vmem:[%s1 + $0x348] sm:$0xff]
  %v128 = vld [vmem:[%s1 + $0x350] sm:$0xff]
  %v129 = vld [vmem:[%s1 + $0x358] sm:$0xff]
  %v130 = vld [vmem:[%s1 + $0x360] sm:$0xff]
  %v131 = vld [vmem:[%s1 + $0x368] sm:$0xff]
  %v132 = vld [vmem:[%s1 + $0x370] sm:$0xff]
  %v133 = vld [vmem:[%s1 + $0x378] sm:$0xff]
  %v134 = vld [vmem:[%s1 + $0x380] sm:$0xff]
  %v135 = vld [vmem:[%s1 + $0x388] sm:$0xff]
  %v136 = vld [vmem:[%s1 + $0x390] sm:$0xff]
  %v137 = vld [vmem:[%s1 + $0x398] sm:$0xff]
  %v138 = vld [vmem:[%s1 + $0x3a0] sm:$0xff]
  %v139 = vld [vmem:[%s1 + $0x3a8] sm:$0xff]
  %v140 = vld [vmem:[%s1 + $0x3b0] sm:$0xff]
  %v141 = vld [vmem:[%s1 + $0x3b8] sm:$0xff]
  %v142 = vld [vmem:[%s1 + $0x3c0] sm:$0xff]
  %v143 = vld [vmem:[%s1 + $0x3c8] sm:$0xff]
  %v144 = vld [vmem:[%s1 + $0x3d0] sm:$0xff]
  %v145 = vld [vmem:[%s1 + $0x3d8] sm:$0xff]
  %v146 = vld [vmem:[%s1 + $0x3e0] sm:$0xff]
  %v147 = vld [vmem:[%s1 + $0x3e8] sm:$0xff]
  %v148 = vld [vmem:[%s1 + $0x3f0] sm:$0xff]
  %v149 = vld [vmem:[%s1 + $0x3f8] sm:$0xff]
  %v150 = vld [vmem:[%s2] sm:$0xff]
  %v152 = vlaneseq
  %v153 = vshrl.u32 %v152, 7
  %v154 = vsub.s32 0, %v153
  %v155 = vrot.slane %v150, %v154
  %v156 = vlaneseq
  %v157 = vshrl.u32 %v156, 7
  %v158 = vsub.s32 1, %v157
  %v159 = vrot.slane %v150, %v158
  %v160 = vlaneseq
  %v161 = vshrl.u32 %v160, 7
  %v162 = vsub.s32 2, %v161
  %v163 = vrot.slane %v150, %v162
  %v164 = vlaneseq
  %v165 = vshrl.u32 %v164, 7
  %v166 = vsub.s32 3, %v165
  %v167 = vrot.slane %v150, %v166
  %v168 = vlaneseq
  %v169 = vshrl.u32 %v168, 7
  %v170 = vsub.s32 4, %v169
  %v171 = vrot.slane %v150, %v170
  %v172 = vlaneseq
  %v173 = vshrl.u32 %v172, 7
  %v174 = vsub.s32 5, %v173
  %v175 = vrot.slane %v150, %v174
  %v176 = vlaneseq
  %v177 = vshrl.u32 %v176, 7
  %v178 = vsub.s32 6, %v177
  %v179 = vrot.slane %v150, %v178
  %v180 = vlaneseq
  %v181 = vshrl.u32 %v180, 7
  %v182 = vsub.s32 7, %v181
  %v183 = vrot.slane %v150, %v182
  %v194 = vunpack.c.l.s4 1966171168
  %v195 = vunpack.c.0.s8 %v194
  %v196 = vlaneseq
  %v197 = vshrl.u32 %v196, 7
  %v198 = vsub.s32 %v195, %v197
  %v199 = vrot.slane %v21, %v198
  %v200 = vcombine.high %v199, %v199
  %v202 = vunpack.c.l.s4 1966171168
  %v203 = vunpack.c.0.s8 %v202
  %v204 = vlaneseq
  %v205 = vshrl.u32 %v204, 7
  %v206 = vsub.s32 %v203, %v205
  %v207 = vrot.slane %v199, %v206
  %v209 = vunpack.c.l.s4 1966171168
  %v210 = vunpack.c.0.s8 %v209
  %v211 = vlaneseq
  %v212 = vshrl.u32 %v211, 7
  %v213 = vsub.s32 %v210, %v212
  %v214 = vrot.slane %v200, %v213
  %v345 = vunpack.c.l.b16 %v22
  %v346 = vunpack.c.h.b16 %v22
  %v347 = vunpack.c.l.b16 %v23
  %v348 = vunpack.c.h.b16 %v23
  %v349 = vunpack.c.l.b16 %v24
  %v350 = vunpack.c.h.b16 %v24
  %v351 = vunpack.c.l.b16 %v25
  %v352 = vunpack.c.h.b16 %v25
  %v353 = vunpack.c.l.b16 %v26
  %v354 = vunpack.c.h.b16 %v26
  %v355 = vunpack.c.l.b16 %v27
  %v356 = vunpack.c.h.b16 %v27
  %v357 = vunpack.c.l.b16 %v28
  %v358 = vunpack.c.h.b16 %v28
  %v359 = vunpack.c.l.b16 %v29
  %v360 = vunpack.c.h.b16 %v29
  %v361 = vunpack.c.l.b16 %v30
  %v362 = vunpack.c.h.b16 %v30
  %v363 = vunpack.c.l.b16 %v31
  %v364 = vunpack.c.h.b16 %v31
  %v365 = vunpack.c.l.b16 %v32
  %v366 = vunpack.c.h.b16 %v32
  %v367 = vunpack.c.l.b16 %v33
  %v368 = vunpack.c.h.b16 %v33
  %v369 = vunpack.c.l.b16 %v34
  %v370 = vunpack.c.h.b16 %v34
  %v371 = vunpack.c.l.b16 %v35
  %v372 = vunpack.c.h.b16 %v35
  %v373 = vunpack.c.l.b16 %v36
  %v374 = vunpack.c.h.b16 %v36
  %v375 = vunpack.c.l.b16 %v37
  %v376 = vunpack.c.h.b16 %v37
  %v377 = vunpack.c.l.b16 %v38
  %v378 = vunpack.c.h.b16 %v38
  %v379 = vunpack.c.l.b16 %v39
  %v380 = vunpack.c.h.b16 %v39
  %v381 = vunpack.c.l.b16 %v40
  %v382 = vunpack.c.h.b16 %v40
  %v383 = vunpack.c.l.b16 %v41
  %v384 = vunpack.c.h.b16 %v41
  %v385 = vunpack.c.l.b16 %v42
  %v386 = vunpack.c.h.b16 %v42
  %v387 = vunpack.c.l.b16 %v43
  %v388 = vunpack.c.h.b16 %v43
  %v389 = vunpack.c.l.b16 %v44
  %v390 = vunpack.c.h.b16 %v44
  %v391 = vunpack.c.l.b16 %v45
  %v392 = vunpack.c.h.b16 %v45
  %v393 = vunpack.c.l.b16 %v46
  %v394 = vunpack.c.h.b16 %v46
  %v395 = vunpack.c.l.b16 %v47
  %v396 = vunpack.c.h.b16 %v47
  %v397 = vunpack.c.l.b16 %v48
  %v398 = vunpack.c.h.b16 %v48
  %v399 = vunpack.c.l.b16 %v49
  %v400 = vunpack.c.h.b16 %v49
  %v401 = vunpack.c.l.b16 %v50
  %v402 = vunpack.c.h.b16 %v50
  %v403 = vunpack.c.l.b16 %v51
  %v404 = vunpack.c.h.b16 %v51
  %v405 = vunpack.c.l.b16 %v52
  %v406 = vunpack.c.h.b16 %v52
  %v407 = vunpack.c.l.b16 %v53
  %v408 = vunpack.c.h.b16 %v53
  %v409 = vunpack.c.l.b16 %v54
  %v410 = vunpack.c.h.b16 %v54
  %v411 = vunpack.c.l.b16 %v55
  %v412 = vunpack.c.h.b16 %v55
  %v413 = vunpack.c.l.b16 %v56
  %v414 = vunpack.c.h.b16 %v56
  %v415 = vunpack.c.l.b16 %v57
  %v416 = vunpack.c.h.b16 %v57
  %v417 = vunpack.c.l.b16 %v58
  %v418 = vunpack.c.h.b16 %v58
  %v419 = vunpack.c.l.b16 %v59
  %v420 = vunpack.c.h.b16 %v59
  %v421 = vunpack.c.l.b16 %v60
  %v422 = vunpack.c.h.b16 %v60
  %v423 = vunpack.c.l.b16 %v61
  %v424 = vunpack.c.h.b16 %v61
  %v425 = vunpack.c.l.b16 %v62
  %v426 = vunpack.c.h.b16 %v62
  %v427 = vunpack.c.l.b16 %v63
  %v428 = vunpack.c.h.b16 %v63
  %v429 = vunpack.c.l.b16 %v64
  %v430 = vunpack.c.h.b16 %v64
  %v431 = vunpack.c.l.b16 %v65
  %v432 = vunpack.c.h.b16 %v65
  %v433 = vunpack.c.l.b16 %v66
  %v434 = vunpack.c.h.b16 %v66
  %v435 = vunpack.c.l.b16 %v67
  %v436 = vunpack.c.h.b16 %v67
  %v437 = vunpack.c.l.b16 %v68
  %v438 = vunpack.c.h.b16 %v68
  %v439 = vunpack.c.l.b16 %v69
  %v440 = vunpack.c.h.b16 %v69
  %v441 = vunpack.c.l.b16 %v70
  %v442 = vunpack.c.h.b16 %v70
  %v443 = vunpack.c.l.b16 %v71
  %v444 = vunpack.c.h.b16 %v71
  %v445 = vunpack.c.l.b16 %v72
  %v446 = vunpack.c.h.b16 %v72
  %v447 = vunpack.c.l.b16 %v73
  %v448 = vunpack.c.h.b16 %v73
  %v449 = vunpack.c.l.b16 %v74
  %v450 = vunpack.c.h.b16 %v74
  %v451 = vunpack.c.l.b16 %v75
  %v452 = vunpack.c.h.b16 %v75
  %v453 = vunpack.c.l.b16 %v76
  %v454 = vunpack.c.h.b16 %v76
  %v455 = vunpack.c.l.b16 %v77
  %v456 = vunpack.c.h.b16 %v77
  %v457 = vunpack.c.l.b16 %v78
  %v458 = vunpack.c.h.b16 %v78
  %v459 = vunpack.c.l.b16 %v79
  %v460 = vunpack.c.h.b16 %v79
  %v461 = vunpack.c.l.b16 %v80
  %v462 = vunpack.c.h.b16 %v80
  %v463 = vunpack.c.l.b16 %v81
  %v464 = vunpack.c.h.b16 %v81
  %v465 = vunpack.c.l.b16 %v82
  %v466 = vunpack.c.h.b16 %v82
  %v467 = vunpack.c.l.b16 %v83
  %v468 = vunpack.c.h.b16 %v83
  %v469 = vunpack.c.l.b16 %v84
  %v470 = vunpack.c.h.b16 %v84
  %v471 = vunpack.c.l.b16 %v85
  %v472 = vunpack.c.h.b16 %v85
  %v473 = vunpack.c.l.b16 %v86
  %v474 = vunpack.c.h.b16 %v86
  %v475 = vunpack.c.l.b16 %v87
  %v476 = vunpack.c.h.b16 %v87
  %v477 = vunpack.c.l.b16 %v88
  %v478 = vunpack.c.h.b16 %v88
  %v479 = vunpack.c.l.b16 %v89
  %v480 = vunpack.c.h.b16 %v89
  %v481 = vunpack.c.l.b16 %v90
  %v482 = vunpack.c.h.b16 %v90
  %v483 = vunpack.c.l.b16 %v91
  %v484 = vunpack.c.h.b16 %v91
  %v485 = vunpack.c.l.b16 %v92
  %v486 = vunpack.c.h.b16 %v92
  %v487 = vunpack.c.l.b16 %v93
  %v488 = vunpack.c.h.b16 %v93
  %v489 = vunpack.c.l.b16 %v94
  %v490 = vunpack.c.h.b16 %v94
  %v491 = vunpack.c.l.b16 %v95
  %v492 = vunpack.c.h.b16 %v95
  %v493 = vunpack.c.l.b16 %v96
  %v494 = vunpack.c.h.b16 %v96
  %v495 = vunpack.c.l.b16 %v97
  %v496 = vunpack.c.h.b16 %v97
  %v497 = vunpack.c.l.b16 %v98
  %v498 = vunpack.c.h.b16 %v98
  %v499 = vunpack.c.l.b16 %v99
  %v500 = vunpack.c.h.b16 %v99
  %v501 = vunpack.c.l.b16 %v100
  %v502 = vunpack.c.h.b16 %v100
  %v503 = vunpack.c.l.b16 %v101
  %v504 = vunpack.c.h.b16 %v101
  %v505 = vunpack.c.l.b16 %v102
  %v506 = vunpack.c.h.b16 %v102
  %v507 = vunpack.c.l.b16 %v103
  %v508 = vunpack.c.h.b16 %v103
  %v509 = vunpack.c.l.b16 %v104
  %v510 = vunpack.c.h.b16 %v104
  %v511 = vunpack.c.l.b16 %v105
  %v512 = vunpack.c.h.b16 %v105
  %v513 = vunpack.c.l.b16 %v106
  %v514 = vunpack.c.h.b16 %v106
  %v515 = vunpack.c.l.b16 %v107
  %v516 = vunpack.c.h.b16 %v107
  %v517 = vunpack.c.l.b16 %v108
  %v518 = vunpack.c.h.b16 %v108
  %v519 = vunpack.c.l.b16 %v109
  %v520 = vunpack.c.h.b16 %v109
  %v521 = vunpack.c.l.b16 %v110
  %v522 = vunpack.c.h.b16 %v110
  %v523 = vunpack.c.l.b16 %v111
  %v524 = vunpack.c.h.b16 %v111
  %v525 = vunpack.c.l.b16 %v112
  %v526 = vunpack.c.h.b16 %v112
  %v527 = vunpack.c.l.b16 %v113
  %v528 = vunpack.c.h.b16 %v113
  %v529 = vunpack.c.l.b16 %v114
  %v530 = vunpack.c.h.b16 %v114
  %v531 = vunpack.c.l.b16 %v115
  %v532 = vunpack.c.h.b16 %v115
  %v533 = vunpack.c.l.b16 %v116
  %v534 = vunpack.c.h.b16 %v116
  %v535 = vunpack.c.l.b16 %v117
  %v536 = vunpack.c.h.b16 %v117
  %v537 = vunpack.c.l.b16 %v118
  %v538 = vunpack.c.h.b16 %v118
  %v539 = vunpack.c.l.b16 %v119
  %v540 = vunpack.c.h.b16 %v119
  %v541 = vunpack.c.l.b16 %v120
  %v542 = vunpack.c.h.b16 %v120
  %v543 = vunpack.c.l.b16 %v121
  %v544 = vunpack.c.h.b16 %v121
  %v545 = vunpack.c.l.b16 %v122
  %v546 = vunpack.c.h.b16 %v122
  %v547 = vunpack.c.l.b16 %v123
  %v548 = vunpack.c.h.b16 %v123
  %v549 = vunpack.c.l.b16 %v124
  %v550 = vunpack.c.h.b16 %v124
  %v551 = vunpack.c.l.b16 %v125
  %v552 = vunpack.c.h.b16 %v125
  %v553 = vunpack.c.l.b16 %v126
  %v554 = vunpack.c.h.b16 %v126
  %v555 = vunpack.c.l.b16 %v127
  %v556 = vunpack.c.h.b16 %v127
  %v557 = vunpack.c.l.b16 %v128
  %v558 = vunpack.c.h.b16 %v128
  %v559 = vunpack.c.l.b16 %v129
  %v560 = vunpack.c.h.b16 %v129
  %v561 = vunpack.c.l.b16 %v130
  %v562 = vunpack.c.h.b16 %v130
  %v563 = vunpack.c.l.b16 %v131
  %v564 = vunpack.c.h.b16 %v131
  %v565 = vunpack.c.l.b16 %v132
  %v566 = vunpack.c.h.b16 %v132
  %v567 = vunpack.c.l.b16 %v133
  %v568 = vunpack.c.h.b16 %v133
  %v569 = vunpack.c.l.b16 %v134
  %v570 = vunpack.c.h.b16 %v134
  %v571 = vunpack.c.l.b16 %v135
  %v572 = vunpack.c.h.b16 %v135
  %v573 = vunpack.c.l.b16 %v136
  %v574 = vunpack.c.h.b16 %v136
  %v575 = vunpack.c.l.b16 %v137
  %v576 = vunpack.c.h.b16 %v137
  %v577 = vunpack.c.l.b16 %v138
  %v578 = vunpack.c.h.b16 %v138
  %v579 = vunpack.c.l.b16 %v139
  %v580 = vunpack.c.h.b16 %v139
  %v581 = vunpack.c.l.b16 %v140
  %v582 = vunpack.c.h.b16 %v140
  %v583 = vunpack.c.l.b16 %v141
  %v584 = vunpack.c.h.b16 %v141
  %v585 = vunpack.c.l.b16 %v142
  %v586 = vunpack.c.h.b16 %v142
  %v587 = vunpack.c.l.b16 %v143
  %v588 = vunpack.c.h.b16 %v143
  %v589 = vunpack.c.l.b16 %v144
  %v590 = vunpack.c.h.b16 %v144
  %v591 = vunpack.c.l.b16 %v145
  %v592 = vunpack.c.h.b16 %v145
  %v593 = vunpack.c.l.b16 %v146
  %v594 = vunpack.c.h.b16 %v146
  %v595 = vunpack.c.l.b16 %v147
  %v596 = vunpack.c.h.b16 %v147
  %v597 = vunpack.c.l.b16 %v148
  %v598 = vunpack.c.h.b16 %v148
  %v599 = vunpack.c.l.b16 %v149
  %v600 = vunpack.c.h.b16 %v149
  %v601 = vpack.c.b16 %v353, %v345
  %v602 = vpack.c.b16 %v354, %v346
  %v603 = vpack.c.b16 %v355, %v347
  %v604 = vpack.c.b16 %v356, %v348
  %v605 = vpack.c.b16 %v357, %v349
  %v606 = vpack.c.b16 %v358, %v350
  %v607 = vpack.c.b16 %v359, %v351
  %v608 = vpack.c.b16 %v360, %v352
  %v609 = vpack.c.b16 %v369, %v361
  %v610 = vpack.c.b16 %v370, %v362
  %v611 = vpack.c.b16 %v371, %v363
  %v612 = vpack.c.b16 %v372, %v364
  %v613 = vpack.c.b16 %v373, %v365
  %v614 = vpack.c.b16 %v374, %v366
  %v615 = vpack.c.b16 %v375, %v367
  %v616 = vpack.c.b16 %v376, %v368
  %v617 = vpack.c.b16 %v385, %v377
  %v618 = vpack.c.b16 %v386, %v378
  %v619 = vpack.c.b16 %v387, %v379
  %v620 = vpack.c.b16 %v388, %v380
  %v621 = vpack.c.b16 %v389, %v381
  %v622 = vpack.c.b16 %v390, %v382
  %v623 = vpack.c.b16 %v391, %v383
  %v624 = vpack.c.b16 %v392, %v384
  %v625 = vpack.c.b16 %v401, %v393
  %v626 = vpack.c.b16 %v402, %v394
  %v627 = vpack.c.b16 %v403, %v395
  %v628 = vpack.c.b16 %v404, %v396
  %v629 = vpack.c.b16 %v405, %v397
  %v630 = vpack.c.b16 %v406, %v398
  %v631 = vpack.c.b16 %v407, %v399
  %v632 = vpack.c.b16 %v408, %v400
  %v633 = vpack.c.b16 %v417, %v409
  %v634 = vpack.c.b16 %v418, %v410
  %v635 = vpack.c.b16 %v419, %v411
  %v636 = vpack.c.b16 %v420, %v412
  %v637 = vpack.c.b16 %v421, %v413
  %v638 = vpack.c.b16 %v422, %v414
  %v639 = vpack.c.b16 %v423, %v415
  %v640 = vpack.c.b16 %v424, %v416
  %v641 = vpack.c.b16 %v433, %v425
  %v642 = vpack.c.b16 %v434, %v426
  %v643 = vpack.c.b16 %v435, %v427
  %v644 = vpack.c.b16 %v436, %v428
  %v645 = vpack.c.b16 %v437, %v429
  %v646 = vpack.c.b16 %v438, %v430
  %v647 = vpack.c.b16 %v439, %v431
  %v648 = vpack.c.b16 %v440, %v432
  %v649 = vpack.c.b16 %v449, %v441
  %v650 = vpack.c.b16 %v450, %v442
  %v651 = vpack.c.b16 %v451, %v443
  %v652 = vpack.c.b16 %v452, %v444
  %v653 = vpack.c.b16 %v453, %v445
  %v654 = vpack.c.b16 %v454, %v446
  %v655 = vpack.c.b16 %v455, %v447
  %v656 = vpack.c.b16 %v456, %v448
  %v657 = vpack.c.b16 %v465, %v457
  %v658 = vpack.c.b16 %v466, %v458
  %v659 = vpack.c.b16 %v467, %v459
  %v660 = vpack.c.b16 %v468, %v460
  %v661 = vpack.c.b16 %v469, %v461
  %v662 = vpack.c.b16 %v470, %v462
  %v663 = vpack.c.b16 %v471, %v463
  %v664 = vpack.c.b16 %v472, %v464
  %v665 = vpack.c.b16 %v481, %v473
  %v666 = vpack.c.b16 %v482, %v474
  %v667 = vpack.c.b16 %v483, %v475
  %v668 = vpack.c.b16 %v484, %v476
  %v669 = vpack.c.b16 %v485, %v477
  %v670 = vpack.c.b16 %v486, %v478
  %v671 = vpack.c.b16 %v487, %v479
  %v672 = vpack.c.b16 %v488, %v480
  %v673 = vpack.c.b16 %v497, %v489
  %v674 = vpack.c.b16 %v498, %v490
  %v675 = vpack.c.b16 %v499, %v491
  %v676 = vpack.c.b16 %v500, %v492
  %v677 = vpack.c.b16 %v501, %v493
  %v678 = vpack.c.b16 %v502, %v494
  %v679 = vpack.c.b16 %v503, %v495
  %v680 = vpack.c.b16 %v504, %v496
  %v681 = vpack.c.b16 %v513, %v505
  %v682 = vpack.c.b16 %v514, %v506
  %v683 = vpack.c.b16 %v515, %v507
  %v684 = vpack.c.b16 %v516, %v508
  %v685 = vpack.c.b16 %v517, %v509
  %v686 = vpack.c.b16 %v518, %v510
  %v687 = vpack.c.b16 %v519, %v511
  %v688 = vpack.c.b16 %v520, %v512
  %v689 = vpack.c.b16 %v529, %v521
  %v690 = vpack.c.b16 %v530, %v522
  %v691 = vpack.c.b16 %v531, %v523
  %v692 = vpack.c.b16 %v532, %v524
  %v693 = vpack.c.b16 %v533, %v525
  %v694 = vpack.c.b16 %v534, %v526
  %v695 = vpack.c.b16 %v535, %v527
  %v696 = vpack.c.b16 %v536, %v528
  %v697 = vpack.c.b16 %v545, %v537
  %v698 = vpack.c.b16 %v546, %v538
  %v699 = vpack.c.b16 %v547, %v539
  %v700 = vpack.c.b16 %v548, %v540
  %v701 = vpack.c.b16 %v549, %v541
  %v702 = vpack.c.b16 %v550, %v542
  %v703 = vpack.c.b16 %v551, %v543
  %v704 = vpack.c.b16 %v552, %v544
  %v705 = vpack.c.b16 %v561, %v553
  %v706 = vpack.c.b16 %v562, %v554
  %v707 = vpack.c.b16 %v563, %v555
  %v708 = vpack.c.b16 %v564, %v556
  %v709 = vpack.c.b16 %v565, %v557
  %v710 = vpack.c.b16 %v566, %v558
  %v711 = vpack.c.b16 %v567, %v559
  %v712 = vpack.c.b16 %v568, %v560
  %v713 = vpack.c.b16 %v577, %v569
  %v714 = vpack.c.b16 %v578, %v570
  %v715 = vpack.c.b16 %v579, %v571
  %v716 = vpack.c.b16 %v580, %v572
  %v717 = vpack.c.b16 %v581, %v573
  %v718 = vpack.c.b16 %v582, %v574
  %v719 = vpack.c.b16 %v583, %v575
  %v720 = vpack.c.b16 %v584, %v576
  %v721 = vpack.c.b16 %v593, %v585
  %v722 = vpack.c.b16 %v594, %v586
  %v723 = vpack.c.b16 %v595, %v587
  %v724 = vpack.c.b16 %v596, %v588
  %v725 = vpack.c.b16 %v597, %v589
  %v726 = vpack.c.b16 %v598, %v590
  %v727 = vpack.c.b16 %v599, %v591
  %v728 = vpack.c.b16 %v600, %v592
  %857 = vmatprep.subr.bf16.mxu0 %v658
  %858 = vmatpush1.bf16.msra.mxu0 %v657
  %859 = vmatprep.subr.bf16.mxu0 %v650
  %860 = vmatpush1.bf16.msra.mxu0 %v649
  %861 = vmatprep.subr.bf16.mxu0 %v642
  %862 = vmatpush1.bf16.msra.mxu0 %v641
  %863 = vmatprep.subr.bf16.mxu0 %v634
  %864 = vmatpush1.bf16.msra.mxu0 %v633
  %865 = vmatprep.subr.bf16.mxu0 %v626
  %866 = vmatpush1.bf16.msra.mxu0 %v625
  %867 = vmatprep.subr.bf16.mxu0 %v618
  %868 = vmatpush1.bf16.msra.mxu0 %v617
  %869 = vmatprep.subr.bf16.mxu0 %v610
  %870 = vmatpush1.bf16.msra.mxu0 %v609
  %871 = vmatprep.subr.bf16.mxu0 %v602
  %872 = vmatpush1.bf16.msra.mxu0 %v601
  %873 = vmatprep.subr.bf16.mxu0 %v722
  %874 = vmatpush2.bf16.msra.mxu0 %v721
  %875 = vmatprep.subr.bf16.mxu0 %v714
  %876 = vmatpush2.bf16.msra.mxu0 %v713
  %877 = vmatprep.subr.bf16.mxu0 %v706
  %878 = vmatpush2.bf16.msra.mxu0 %v705
  %879 = vmatprep.subr.bf16.mxu0 %v698
  %880 = vmatpush2.bf16.msra.mxu0 %v697
  %881 = vmatprep.subr.bf16.mxu0 %v690
  %882 = vmatpush2.bf16.msra.mxu0 %v689
  %883 = vmatprep.subr.bf16.mxu0 %v682
  %884 = vmatpush2.bf16.msra.mxu0 %v681
  %885 = vmatprep.subr.bf16.mxu0 %v674
  %886 = vmatpush2.bf16.msra.mxu0 %v673
  %887 = vmatprep.subr.bf16.mxu0 %v666
  %888 = vmatpush2.bf16.msra.mxu0 %v665
  %889 = vmatprep.mubr.bf16.mxu0 %v214
  %890 = vmatmul.mubr.bf16.gmra.mxu0 %v207
  %v891 = vpop.f32.mrf.mxu0
  %v892 = vadd.f32 %v155, %v891
  %v893 = vpop.f32.mrf.mxu0
  %v894 = vadd.f32 %v159, %v893
  %v895 = vpop.f32.mrf.mxu0
  %v896 = vpop.f32.mrf.mxu0
  %897 = vdwg.mxu0
  %898 = vmatprep.subr.bf16.mxu0 %v660
  %899 = vmatpush1.bf16.msra.mxu0 %v659
  %900 = vmatprep.subr.bf16.mxu0 %v652
  %901 = vmatpush1.bf16.msra.mxu0 %v651
  %902 = vmatprep.subr.bf16.mxu0 %v644
  %903 = vmatpush1.bf16.msra.mxu0 %v643
  %904 = vmatprep.subr.bf16.mxu0 %v636
  %905 = vmatpush1.bf16.msra.mxu0 %v635
  %906 = vmatprep.subr.bf16.mxu0 %v628
  %907 = vmatpush1.bf16.msra.mxu0 %v627
  %908 = vmatprep.subr.bf16.mxu0 %v620
  %909 = vmatpush1.bf16.msra.mxu0 %v619
  %910 = vmatprep.subr.bf16.mxu0 %v612
  %911 = vmatpush1.bf16.msra.mxu0 %v611
  %912 = vmatprep.subr.bf16.mxu0 %v604
  %913 = vmatpush1.bf16.msra.mxu0 %v603
  %914 = vmatprep.subr.bf16.mxu0 %v724
  %915 = vmatpush2.bf16.msra.mxu0 %v723
  %916 = vmatprep.subr.bf16.mxu0 %v716
  %917 = vmatpush2.bf16.msra.mxu0 %v715
  %918 = vmatprep.subr.bf16.mxu0 %v708
  %919 = vmatpush2.bf16.msra.mxu0 %v707
  %920 = vmatprep.subr.bf16.mxu0 %v700
  %921 = vmatpush2.bf16.msra.mxu0 %v699
  %922 = vmatprep.subr.bf16.mxu0 %v692
  %923 = vmatpush2.bf16.msra.mxu0 %v691
  %924 = vmatprep.subr.bf16.mxu0 %v684
  %925 = vmatpush2.bf16.msra.mxu0 %v683
  %926 = vmatprep.subr.bf16.mxu0 %v676
  %927 = vmatpush2.bf16.msra.mxu0 %v675
  %928 = vmatprep.subr.bf16.mxu0 %v668
  %929 = vmatpush2.bf16.msra.mxu0 %v667
  %930 = vmatprep.mubr.bf16.mxu0 %v214
  %931 = vmatmul.mubr.bf16.gmra.mxu0 %v207
  %v932 = vpop.f32.mrf.mxu0
  %v933 = vadd.f32 %v163, %v932
  %v934 = vpop.f32.mrf.mxu0
  %v935 = vadd.f32 %v167, %v934
  %v936 = vpop.f32.mrf.mxu0
  %v937 = vpop.f32.mrf.mxu0
  %938 = vdwg.mxu0
  %939 = vmatprep.subr.bf16.mxu0 %v662
  %940 = vmatpush1.bf16.msra.mxu0 %v661
  %941 = vmatprep.subr.bf16.mxu0 %v654
  %942 = vmatpush1.bf16.msra.mxu0 %v653
  %943 = vmatprep.subr.bf16.mxu0 %v646
  %944 = vmatpush1.bf16.msra.mxu0 %v645
  %945 = vmatprep.subr.bf16.mxu0 %v638
  %946 = vmatpush1.bf16.msra.mxu0 %v637
  %947 = vmatprep.subr.bf16.mxu0 %v630
  %948 = vmatpush1.bf16.msra.mxu0 %v629
  %949 = vmatprep.subr.bf16.mxu0 %v622
  %950 = vmatpush1.bf16.msra.mxu0 %v621
  %951 = vmatprep.subr.bf16.mxu0 %v614
  %952 = vmatpush1.bf16.msra.mxu0 %v613
  %953 = vmatprep.subr.bf16.mxu0 %v606
  %954 = vmatpush1.bf16.msra.mxu0 %v605
  %955 = vmatprep.subr.bf16.mxu0 %v726
  %956 = vmatpush2.bf16.msra.mxu0 %v725
  %957 = vmatprep.subr.bf16.mxu0 %v718
  %958 = vmatpush2.bf16.msra.mxu0 %v717
  %959 = vmatprep.subr.bf16.mxu0 %v710
  %960 = vmatpush2.bf16.msra.mxu0 %v709
  %961 = vmatprep.subr.bf16.mxu0 %v702
  %962 = vmatpush2.bf16.msra.mxu0 %v701
  %963 = vmatprep.subr.bf16.mxu0 %v694
  %964 = vmatpush2.bf16.msra.mxu0 %v693
  %965 = vmatprep.subr.bf16.mxu0 %v686
  %966 = vmatpush2.bf16.msra.mxu0 %v685
  %967 = vmatprep.subr.bf16.mxu0 %v678
  %968 = vmatpush2.bf16.msra.mxu0 %v677
  %969 = vmatprep.subr.bf16.mxu0 %v670
  %970 = vmatpush2.bf16.msra.mxu0 %v669
  %971 = vmatprep.mubr.bf16.mxu0 %v214
  %972 = vmatmul.mubr.bf16.gmra.mxu0 %v207
  %v973 = vpop.f32.mrf.mxu0
  %v974 = vadd.f32 %v171, %v973
  %v975 = vpop.f32.mrf.mxu0
  %v976 = vadd.f32 %v175, %v975
  %v977 = vpop.f32.mrf.mxu0
  %v978 = vpop.f32.mrf.mxu0
  %979 = vdwg.mxu0
  %980 = vmatprep.subr.bf16.mxu0 %v664
  %981 = vmatpush1.bf16.msra.mxu0 %v663
  %982 = vmatprep.subr.bf16.mxu0 %v656
  %983 = vmatpush1.bf16.msra.mxu0 %v655
  %984 = vmatprep.subr.bf16.mxu0 %v648
  %985 = vmatpush1.bf16.msra.mxu0 %v647
  %986 = vmatprep.subr.bf16.mxu0 %v640
  %987 = vmatpush1.bf16.msra.mxu0 %v639
  %988 = vmatprep.subr.bf16.mxu0 %v632
  %989 = vmatpush1.bf16.msra.mxu0 %v631
  %990 = vmatprep.subr.bf16.mxu0 %v624
  %991 = vmatpush1.bf16.msra.mxu0 %v623
  %992 = vmatprep.subr.bf16.mxu0 %v616
  %993 = vmatpush1.bf16.msra.mxu0 %v615
  %994 = vmatprep.subr.bf16.mxu0 %v608
  %995 = vmatpush1.bf16.msra.mxu0 %v607
  %996 = vmatprep.subr.bf16.mxu0 %v728
  %997 = vmatpush2.bf16.msra.mxu0 %v727
  %998 = vmatprep.subr.bf16.mxu0 %v720
  %999 = vmatpush2.bf16.msra.mxu0 %v719
  %1000 = vmatprep.subr.bf16.mxu0 %v712
  %1001 = vmatpush2.bf16.msra.mxu0 %v711
  %1002 = vmatprep.subr.bf16.mxu0 %v704
  %1003 = vmatpush2.bf16.msra.mxu0 %v703
  %1004 = vmatprep.subr.bf16.mxu0 %v696
  %1005 = vmatpush2.bf16.msra.mxu0 %v695
  %1006 = vmatprep.subr.bf16.mxu0 %v688
  %1007 = vmatpush2.bf16.msra.mxu0 %v687
  %1008 = vmatprep.subr.bf16.mxu0 %v680
  %1009 = vmatpush2.bf16.msra.mxu0 %v679
  %1010 = vmatprep.subr.bf16.mxu0 %v672
  %1011 = vmatpush2.bf16.msra.mxu0 %v671
  %1012 = vmatprep.mubr.bf16.mxu0 %v214
  %1013 = vmatmul.mubr.bf16.gmra.mxu0 %v207
  %v1014 = vpop.f32.mrf.mxu0
  %v1015 = vadd.f32 %v179, %v1014
  %v1016 = vpop.f32.mrf.mxu0
  %v1017 = vadd.f32 %v183, %v1016
  %v1018 = vpop.f32.mrf.mxu0
  %v1019 = vpop.f32.mrf.mxu0
  %1020 = vdwg.mxu0
  %v1021 = vmax.f32 %v892, 0.0
  %v1022 = vmax.f32 %v894, 0.0
  %v1023 = vmax.f32 %v933, 0.0
  %v1024 = vmax.f32 %v935, 0.0
  %v1025 = vmax.f32 %v974, 0.0
  %v1026 = vmax.f32 %v976, 0.0
  %v1027 = vmax.f32 %v1015, 0.0
  %v1028 = vmax.f32 %v1017, 0.0
  %v1029 = vpack.c.bf16 %v1021, %v1021
  %v1030 = vpack.c.bf16 %v1022, %v1022
  %v1031 = vpack.c.bf16 %v1023, %v1023
  %v1032 = vpack.c.bf16 %v1024, %v1024
  %v1033 = vpack.c.bf16 %v1025, %v1025
  %v1034 = vpack.c.bf16 %v1026, %v1026
  %v1035 = vpack.c.bf16 %v1027, %v1027
  %v1036 = vpack.c.bf16 %v1028, %v1028
  %v1037 = vld [vmem:[%s3] sm:$0xf]
  %v1038 = vld [vmem:[%s3 + $0x4] sm:$0xf]
  %v1039 = vld [vmem:[%s3 + $0x8] sm:$0xf]
  %v1040 = vld [vmem:[%s3 + $0xc] sm:$0xf]
  %v1041 = vld [vmem:[%s3 + $0x10] sm:$0xf]
  %v1042 = vld [vmem:[%s3 + $0x14] sm:$0xf]
  %v1043 = vld [vmem:[%s3 + $0x18] sm:$0xf]
  %v1044 = vld [vmem:[%s3 + $0x1c] sm:$0xf]
  %v1045 = vld [vmem:[%s3 + $0x20] sm:$0xf]
  %v1046 = vld [vmem:[%s3 + $0x24] sm:$0xf]
  %v1047 = vld [vmem:[%s3 + $0x28] sm:$0xf]
  %v1048 = vld [vmem:[%s3 + $0x2c] sm:$0xf]
  %v1049 = vld [vmem:[%s3 + $0x30] sm:$0xf]
  %v1050 = vld [vmem:[%s3 + $0x34] sm:$0xf]
  %v1051 = vld [vmem:[%s3 + $0x38] sm:$0xf]
  %v1052 = vld [vmem:[%s3 + $0x3c] sm:$0xf]
  %v1053 = vld [vmem:[%s3 + $0x40] sm:$0xf]
  %v1054 = vld [vmem:[%s3 + $0x44] sm:$0xf]
  %v1055 = vld [vmem:[%s3 + $0x48] sm:$0xf]
  %v1056 = vld [vmem:[%s3 + $0x4c] sm:$0xf]
  %v1057 = vld [vmem:[%s3 + $0x50] sm:$0xf]
  %v1058 = vld [vmem:[%s3 + $0x54] sm:$0xf]
  %v1059 = vld [vmem:[%s3 + $0x58] sm:$0xf]
  %v1060 = vld [vmem:[%s3 + $0x5c] sm:$0xf]
  %v1061 = vld [vmem:[%s3 + $0x60] sm:$0xf]
  %v1062 = vld [vmem:[%s3 + $0x64] sm:$0xf]
  %v1063 = vld [vmem:[%s3 + $0x68] sm:$0xf]
  %v1064 = vld [vmem:[%s3 + $0x6c] sm:$0xf]
  %v1065 = vld [vmem:[%s3 + $0x70] sm:$0xf]
  %v1066 = vld [vmem:[%s3 + $0x74] sm:$0xf]
  %v1067 = vld [vmem:[%s3 + $0x78] sm:$0xf]
  %v1068 = vld [vmem:[%s3 + $0x7c] sm:$0xf]
  %v1069 = vld [vmem:[%s3 + $0x80] sm:$0xf]
  %v1070 = vld [vmem:[%s3 + $0x84] sm:$0xf]
  %v1071 = vld [vmem:[%s3 + $0x88] sm:$0xf]
  %v1072 = vld [vmem:[%s3 + $0x8c] sm:$0xf]
  %v1073 = vld [vmem:[%s3 + $0x90] sm:$0xf]
  %v1074 = vld [vmem:[%s3 + $0x94] sm:$0xf]
  %v1075 = vld [vmem:[%s3 + $0x98] sm:$0xf]
  %v1076 = vld [vmem:[%s3 + $0x9c] sm:$0xf]
  %v1077 = vld [vmem:[%s3 + $0xa0] sm:$0xf]
  %v1078 = vld [vmem:[%s3 + $0xa4] sm:$0xf]
  %v1079 = vld [vmem:[%s3 + $0xa8] sm:$0xf]
  %v1080 = vld [vmem:[%s3 + $0xac] sm:$0xf]
  %v1081 = vld [vmem:[%s3 + $0xb0] sm:$0xf]
  %v1082 = vld [vmem:[%s3 + $0xb4] sm:$0xf]
  %v1083 = vld [vmem:[%s3 + $0xb8] sm:$0xf]
  %v1084 = vld [vmem:[%s3 + $0xbc] sm:$0xf]
  %v1085 = vld [vmem:[%s3 + $0xc0] sm:$0xf]
  %v1086 = vld [vmem:[%s3 + $0xc4] sm:$0xf]
  %v1087 = vld [vmem:[%s3 + $0xc8] sm:$0xf]
  %v1088 = vld [vmem:[%s3 + $0xcc] sm:$0xf]
  %v1089 = vld [vmem:[%s3 + $0xd0] sm:$0xf]
  %v1090 = vld [vmem:[%s3 + $0xd4] sm:$0xf]
  %v1091 = vld [vmem:[%s3 + $0xd8] sm:$0xf]
  %v1092 = vld [vmem:[%s3 + $0xdc] sm:$0xf]
  %v1093 = vld [vmem:[%s3 + $0xe0] sm:$0xf]
  %v1094 = vld [vmem:[%s3 + $0xe4] sm:$0xf]
  %v1095 = vld [vmem:[%s3 + $0xe8] sm:$0xf]
  %v1096 = vld [vmem:[%s3 + $0xec] sm:$0xf]
  %v1097 = vld [vmem:[%s3 + $0xf0] sm:$0xf]
  %v1098 = vld [vmem:[%s3 + $0xf4] sm:$0xf]
  %v1099 = vld [vmem:[%s3 + $0xf8] sm:$0xf]
  %v1100 = vld [vmem:[%s3 + $0xfc] sm:$0xf]
  %v1101 = vld [vmem:[%s3 + $0x100] sm:$0xf]
  %v1102 = vld [vmem:[%s3 + $0x104] sm:$0xf]
  %v1103 = vld [vmem:[%s3 + $0x108] sm:$0xf]
  %v1104 = vld [vmem:[%s3 + $0x10c] sm:$0xf]
  %v1105 = vld [vmem:[%s3 + $0x110] sm:$0xf]
  %v1106 = vld [vmem:[%s3 + $0x114] sm:$0xf]
  %v1107 = vld [vmem:[%s3 + $0x118] sm:$0xf]
  %v1108 = vld [vmem:[%s3 + $0x11c] sm:$0xf]
  %v1109 = vld [vmem:[%s3 + $0x120] sm:$0xf]
  %v1110 = vld [vmem:[%s3 + $0x124] sm:$0xf]
  %v1111 = vld [vmem:[%s3 + $0x128] sm:$0xf]
  %v1112 = vld [vmem:[%s3 + $0x12c] sm:$0xf]
  %v1113 = vld [vmem:[%s3 + $0x130] sm:$0xf]
  %v1114 = vld [vmem:[%s3 + $0x134] sm:$0xf]
  %v1115 = vld [vmem:[%s3 + $0x138] sm:$0xf]
  %v1116 = vld [vmem:[%s3 + $0x13c] sm:$0xf]
  %v1117 = vld [vmem:[%s3 + $0x140] sm:$0xf]
  %v1118 = vld [vmem:[%s3 + $0x144] sm:$0xf]
  %v1119 = vld [vmem:[%s3 + $0x148] sm:$0xf]
  %v1120 = vld [vmem:[%s3 + $0x14c] sm:$0xf]
  %v1121 = vld [vmem:[%s3 + $0x150] sm:$0xf]
  %v1122 = vld [vmem:[%s3 + $0x154] sm:$0xf]
  %v1123 = vld [vmem:[%s3 + $0x158] sm:$0xf]
  %v1124 = vld [vmem:[%s3 + $0x15c] sm:$0xf]
  %v1125 = vld [vmem:[%s3 + $0x160] sm:$0xf]
  %v1126 = vld [vmem:[%s3 + $0x164] sm:$0xf]
  %v1127 = vld [vmem:[%s3 + $0x168] sm:$0xf]
  %v1128 = vld [vmem:[%s3 + $0x16c] sm:$0xf]
  %v1129 = vld [vmem:[%s3 + $0x170] sm:$0xf]
  %v1130 = vld [vmem:[%s3 + $0x174] sm:$0xf]
  %v1131 = vld [vmem:[%s3 + $0x178] sm:$0xf]
  %v1132 = vld [vmem:[%s3 + $0x17c] sm:$0xf]
  %v1133 = vld [vmem:[%s3 + $0x180] sm:$0xf]
  %v1134 = vld [vmem:[%s3 + $0x184] sm:$0xf]
  %v1135 = vld [vmem:[%s3 + $0x188] sm:$0xf]
  %v1136 = vld [vmem:[%s3 + $0x18c] sm:$0xf]
  %v1137 = vld [vmem:[%s3 + $0x190] sm:$0xf]
  %v1138 = vld [vmem:[%s3 + $0x194] sm:$0xf]
  %v1139 = vld [vmem:[%s3 + $0x198] sm:$0xf]
  %v1140 = vld [vmem:[%s3 + $0x19c] sm:$0xf]
  %v1141 = vld [vmem:[%s3 + $0x1a0] sm:$0xf]
  %v1142 = vld [vmem:[%s3 + $0x1a4] sm:$0xf]
  %v1143 = vld [vmem:[%s3 + $0x1a8] sm:$0xf]
  %v1144 = vld [vmem:[%s3 + $0x1ac] sm:$0xf]
  %v1145 = vld [vmem:[%s3 + $0x1b0] sm:$0xf]
  %v1146 = vld [vmem:[%s3 + $0x1b4] sm:$0xf]
  %v1147 = vld [vmem:[%s3 + $0x1b8] sm:$0xf]
  %v1148 = vld [vmem:[%s3 + $0x1bc] sm:$0xf]
  %v1149 = vld [vmem:[%s3 + $0x1c0] sm:$0xf]
  %v1150 = vld [vmem:[%s3 + $0x1c4] sm:$0xf]
  %v1151 = vld [vmem:[%s3 + $0x1c8] sm:$0xf]
  %v1152 = vld [vmem:[%s3 + $0x1cc] sm:$0xf]
  %v1153 = vld [vmem:[%s3 + $0x1d0] sm:$0xf]
  %v1154 = vld [vmem:[%s3 + $0x1d4] sm:$0xf]
  %v1155 = vld [vmem:[%s3 + $0x1d8] sm:$0xf]
  %v1156 = vld [vmem:[%s3 + $0x1dc] sm:$0xf]
  %v1157 = vld [vmem:[%s3 + $0x1e0] sm:$0xf]
  %v1158 = vld [vmem:[%s3 + $0x1e4] sm:$0xf]
  %v1159 = vld [vmem:[%s3 + $0x1e8] sm:$0xf]
  %v1160 = vld [vmem:[%s3 + $0x1ec] sm:$0xf]
  %v1161 = vld [vmem:[%s3 + $0x1f0] sm:$0xf]
  %v1162 = vld [vmem:[%s3 + $0x1f4] sm:$0xf]
  %v1163 = vld [vmem:[%s3 + $0x1f8] sm:$0xf]
  %v1164 = vld [vmem:[%s3 + $0x1fc] sm:$0xf]
  %v1165 = vld [vmem:[%s4] sm:$0x1]
  %v1167 = vlaneseq
  %v1168 = vshrl.u32 %v1167, 7
  %v1169 = vsub.s32 0, %v1168
  %v1170 = vrot.slane %v1165, %v1169
  %v1300 = vunpack.c.l.b16 %v1037
  %v1301 = vunpack.c.l.b16 %v1038
  %v1302 = vunpack.c.l.b16 %v1039
  %v1303 = vunpack.c.l.b16 %v1040
  %v1304 = vunpack.c.l.b16 %v1041
  %v1305 = vunpack.c.l.b16 %v1042
  %v1306 = vunpack.c.l.b16 %v1043
  %v1307 = vunpack.c.l.b16 %v1044
  %v1308 = vunpack.c.l.b16 %v1045
  %v1309 = vunpack.c.l.b16 %v1046
  %v1310 = vunpack.c.l.b16 %v1047
  %v1311 = vunpack.c.l.b16 %v1048
  %v1312 = vunpack.c.l.b16 %v1049
  %v1313 = vunpack.c.l.b16 %v1050
  %v1314 = vunpack.c.l.b16 %v1051
  %v1315 = vunpack.c.l.b16 %v1052
  %v1316 = vunpack.c.l.b16 %v1053
  %v1317 = vunpack.c.l.b16 %v1054
  %v1318 = vunpack.c.l.b16 %v1055
  %v1319 = vunpack.c.l.b16 %v1056
  %v1320 = vunpack.c.l.b16 %v1057
  %v1321 = vunpack.c.l.b16 %v1058
  %v1322 = vunpack.c.l.b16 %v1059
  %v1323 = vunpack.c.l.b16 %v1060
  %v1324 = vunpack.c.l.b16 %v1061
  %v1325 = vunpack.c.l.b16 %v1062
  %v1326 = vunpack.c.l.b16 %v1063
  %v1327 = vunpack.c.l.b16 %v1064
  %v1328 = vunpack.c.l.b16 %v1065
  %v1329 = vunpack.c.l.b16 %v1066
  %v1330 = vunpack.c.l.b16 %v1067
  %v1331 = vunpack.c.l.b16 %v1068
  %v1332 = vunpack.c.l.b16 %v1069
  %v1333 = vunpack.c.l.b16 %v1070
  %v1334 = vunpack.c.l.b16 %v1071
  %v1335 = vunpack.c.l.b16 %v1072
  %v1336 = vunpack.c.l.b16 %v1073
  %v1337 = vunpack.c.l.b16 %v1074
  %v1338 = vunpack.c.l.b16 %v1075
  %v1339 = vunpack.c.l.b16 %v1076
  %v1340 = vunpack.c.l.b16 %v1077
  %v1341 = vunpack.c.l.b16 %v1078
  %v1342 = vunpack.c.l.b16 %v1079
  %v1343 = vunpack.c.l.b16 %v1080
  %v1344 = vunpack.c.l.b16 %v1081
  %v1345 = vunpack.c.l.b16 %v1082
  %v1346 = vunpack.c.l.b16 %v1083
  %v1347 = vunpack.c.l.b16 %v1084
  %v1348 = vunpack.c.l.b16 %v1085
  %v1349 = vunpack.c.l.b16 %v1086
  %v1350 = vunpack.c.l.b16 %v1087
  %v1351 = vunpack.c.l.b16 %v1088
  %v1352 = vunpack.c.l.b16 %v1089
  %v1353 = vunpack.c.l.b16 %v1090
  %v1354 = vunpack.c.l.b16 %v1091
  %v1355 = vunpack.c.l.b16 %v1092
  %v1356 = vunpack.c.l.b16 %v1093
  %v1357 = vunpack.c.l.b16 %v1094
  %v1358 = vunpack.c.l.b16 %v1095
  %v1359 = vunpack.c.l.b16 %v1096
  %v1360 = vunpack.c.l.b16 %v1097
  %v1361 = vunpack.c.l.b16 %v1098
  %v1362 = vunpack.c.l.b16 %v1099
  %v1363 = vunpack.c.l.b16 %v1100
  %v1364 = vunpack.c.l.b16 %v1101
  %v1365 = vunpack.c.l.b16 %v1102
  %v1366 = vunpack.c.l.b16 %v1103
  %v1367 = vunpack.c.l.b16 %v1104
  %v1368 = vunpack.c.l.b16 %v1105
  %v1369 = vunpack.c.l.b16 %v1106
  %v1370 = vunpack.c.l.b16 %v1107
  %v1371 = vunpack.c.l.b16 %v1108
  %v1372 = vunpack.c.l.b16 %v1109
  %v1373 = vunpack.c.l.b16 %v1110
  %v1374 = vunpack.c.l.b16 %v1111
  %v1375 = vunpack.c.l.b16 %v1112
  %v1376 = vunpack.c.l.b16 %v1113
  %v1377 = vunpack.c.l.b16 %v1114
  %v1378 = vunpack.c.l.b16 %v1115
  %v1379 = vunpack.c.l.b16 %v1116
  %v1380 = vunpack.c.l.b16 %v1117
  %v1381 = vunpack.c.l.b16 %v1118
  %v1382 = vunpack.c.l.b16 %v1119
  %v1383 = vunpack.c.l.b16 %v1120
  %v1384 = vunpack.c.l.b16 %v1121
  %v1385 = vunpack.c.l.b16 %v1122
  %v1386 = vunpack.c.l.b16 %v1123
  %v1387 = vunpack.c.l.b16 %v1124
  %v1388 = vunpack.c.l.b16 %v1125
  %v1389 = vunpack.c.l.b16 %v1126
  %v1390 = vunpack.c.l.b16 %v1127
  %v1391 = vunpack.c.l.b16 %v1128
  %v1392 = vunpack.c.l.b16 %v1129
  %v1393 = vunpack.c.l.b16 %v1130
  %v1394 = vunpack.c.l.b16 %v1131
  %v1395 = vunpack.c.l.b16 %v1132
  %v1396 = vunpack.c.l.b16 %v1133
  %v1397 = vunpack.c.l.b16 %v1134
  %v1398 = vunpack.c.l.b16 %v1135
  %v1399 = vunpack.c.l.b16 %v1136
  %v1400 = vunpack.c.l.b16 %v1137
  %v1401 = vunpack.c.l.b16 %v1138
  %v1402 = vunpack.c.l.b16 %v1139
  %v1403 = vunpack.c.l.b16 %v1140
  %v1404 = vunpack.c.l.b16 %v1141
  %v1405 = vunpack.c.l.b16 %v1142
  %v1406 = vunpack.c.l.b16 %v1143
  %v1407 = vunpack.c.l.b16 %v1144
  %v1408 = vunpack.c.l.b16 %v1145
  %v1409 = vunpack.c.l.b16 %v1146
  %v1410 = vunpack.c.l.b16 %v1147
  %v1411 = vunpack.c.l.b16 %v1148
  %v1412 = vunpack.c.l.b16 %v1149
  %v1413 = vunpack.c.l.b16 %v1150
  %v1414 = vunpack.c.l.b16 %v1151
  %v1415 = vunpack.c.l.b16 %v1152
  %v1416 = vunpack.c.l.b16 %v1153
  %v1417 = vunpack.c.l.b16 %v1154
  %v1418 = vunpack.c.l.b16 %v1155
  %v1419 = vunpack.c.l.b16 %v1156
  %v1420 = vunpack.c.l.b16 %v1157
  %v1421 = vunpack.c.l.b16 %v1158
  %v1422 = vunpack.c.l.b16 %v1159
  %v1423 = vunpack.c.l.b16 %v1160
  %v1424 = vunpack.c.l.b16 %v1161
  %v1425 = vunpack.c.l.b16 %v1162
  %v1426 = vunpack.c.l.b16 %v1163
  %v1427 = vunpack.c.l.b16 %v1164
  %v1428 = vpack.c.b16 %v1301, %v1300
  %v1429 = vpack.c.b16 %v1303, %v1302
  %v1430 = vpack.c.b16 %v1305, %v1304
  %v1431 = vpack.c.b16 %v1307, %v1306
  %v1432 = vpack.c.b16 %v1309, %v1308
  %v1433 = vpack.c.b16 %v1311, %v1310
  %v1434 = vpack.c.b16 %v1313, %v1312
  %v1435 = vpack.c.b16 %v1315, %v1314
  %v1436 = vpack.c.b16 %v1317, %v1316
  %v1437 = vpack.c.b16 %v1319, %v1318
  %v1438 = vpack.c.b16 %v1321, %v1320
  %v1439 = vpack.c.b16 %v1323, %v1322
  %v1440 = vpack.c.b16 %v1325, %v1324
  %v1441 = vpack.c.b16 %v1327, %v1326
  %v1442 = vpack.c.b16 %v1329, %v1328
  %v1443 = vpack.c.b16 %v1331, %v1330
  %v1444 = vpack.c.b16 %v1333, %v1332
  %v1445 = vpack.c.b16 %v1335, %v1334
  %v1446 = vpack.c.b16 %v1337, %v1336
  %v1447 = vpack.c.b16 %v1339, %v1338
  %v1448 = vpack.c.b16 %v1341, %v1340
  %v1449 = vpack.c.b16 %v1343, %v1342
  %v1450 = vpack.c.b16 %v1345, %v1344
  %v1451 = vpack.c.b16 %v1347, %v1346
  %v1452 = vpack.c.b16 %v1349, %v1348
  %v1453 = vpack.c.b16 %v1351, %v1350
  %v1454 = vpack.c.b16 %v1353, %v1352
  %v1455 = vpack.c.b16 %v1355, %v1354
  %v1456 = vpack.c.b16 %v1357, %v1356
  %v1457 = vpack.c.b16 %v1359, %v1358
  %v1458 = vpack.c.b16 %v1361, %v1360
  %v1459 = vpack.c.b16 %v1363, %v1362
  %v1460 = vpack.c.b16 %v1365, %v1364
  %v1461 = vpack.c.b16 %v1367, %v1366
  %v1462 = vpack.c.b16 %v1369, %v1368
  %v1463 = vpack.c.b16 %v1371, %v1370
  %v1464 = vpack.c.b16 %v1373, %v1372
  %v1465 = vpack.c.b16 %v1375, %v1374
  %v1466 = vpack.c.b16 %v1377, %v1376
  %v1467 = vpack.c.b16 %v1379, %v1378
  %v1468 = vpack.c.b16 %v1381, %v1380
  %v1469 = vpack.c.b16 %v1383, %v1382
  %v1470 = vpack.c.b16 %v1385, %v1384
  %v1471 = vpack.c.b16 %v1387, %v1386
  %v1472 = vpack.c.b16 %v1389, %v1388
  %v1473 = vpack.c.b16 %v1391, %v1390
  %v1474 = vpack.c.b16 %v1393, %v1392
  %v1475 = vpack.c.b16 %v1395, %v1394
  %v1476 = vpack.c.b16 %v1397, %v1396
  %v1477 = vpack.c.b16 %v1399, %v1398
  %v1478 = vpack.c.b16 %v1401, %v1400
  %v1479 = vpack.c.b16 %v1403, %v1402
  %v1480 = vpack.c.b16 %v1405, %v1404
  %v1481 = vpack.c.b16 %v1407, %v1406
  %v1482 = vpack.c.b16 %v1409, %v1408
  %v1483 = vpack.c.b16 %v1411, %v1410
  %v1484 = vpack.c.b16 %v1413, %v1412
  %v1485 = vpack.c.b16 %v1415, %v1414
  %v1486 = vpack.c.b16 %v1417, %v1416
  %v1487 = vpack.c.b16 %v1419, %v1418
  %v1488 = vpack.c.b16 %v1421, %v1420
  %v1489 = vpack.c.b16 %v1423, %v1422
  %v1490 = vpack.c.b16 %v1425, %v1424
  %v1491 = vpack.c.b16 %v1427, %v1426
  %1556 = vmatprep.subr.bf16.mxu0 0
  %1557 = vmatpush1.bf16.msra.mxu0 %v1435
  %1558 = vmatprep.subr.bf16.mxu0 0
  %1559 = vmatpush1.bf16.msra.mxu0 %v1434
  %1560 = vmatprep.subr.bf16.mxu0 0
  %1561 = vmatpush1.bf16.msra.mxu0 %v1433
  %1562 = vmatprep.subr.bf16.mxu0 0
  %1563 = vmatpush1.bf16.msra.mxu0 %v1432
  %1564 = vmatprep.subr.bf16.mxu0 0
  %1565 = vmatpush1.bf16.msra.mxu0 %v1431
  %1566 = vmatprep.subr.bf16.mxu0 0
  %1567 = vmatpush1.bf16.msra.mxu0 %v1430
  %1568 = vmatprep.subr.bf16.mxu0 0
  %1569 = vmatpush1.bf16.msra.mxu0 %v1429
  %1570 = vmatprep.subr.bf16.mxu0 0
  %1571 = vmatpush1.bf16.msra.mxu0 %v1428
  %1572 = vmatprep.subr.bf16.mxu0 0
  %1573 = vmatpush2.bf16.msra.mxu0 %v1443
  %1574 = vmatprep.subr.bf16.mxu0 0
  %1575 = vmatpush2.bf16.msra.mxu0 %v1442
  %1576 = vmatprep.subr.bf16.mxu0 0
  %1577 = vmatpush2.bf16.msra.mxu0 %v1441
  %1578 = vmatprep.subr.bf16.mxu0 0
  %1579 = vmatpush2.bf16.msra.mxu0 %v1440
  %1580 = vmatprep.subr.bf16.mxu0 0
  %1581 = vmatpush2.bf16.msra.mxu0 %v1439
  %1582 = vmatprep.subr.bf16.mxu0 0
  %1583 = vmatpush2.bf16.msra.mxu0 %v1438
  %1584 = vmatprep.subr.bf16.mxu0 0
  %1585 = vmatpush2.bf16.msra.mxu0 %v1437
  %1586 = vmatprep.subr.bf16.mxu0 0
  %1587 = vmatpush2.bf16.msra.mxu0 %v1436
  %1588 = vmatprep.mubr.bf16.mxu0 %v1030
  %1589 = vmatmul.mubr.bf16.gmra.mxu0 %v1029
  %v1590 = vpop.f32.mrf.mxu0
  %v1591 = vadd.f32 %v1170, %v1590
  %v1592 = vpop.f32.mrf.mxu0
  %v1593 = vpop.f32.mrf.mxu0
  %v1594 = vpop.f32.mrf.mxu0
  %1595 = vdwg.mxu0
  %1596 = vmatprep.subr.bf16.mxu0 0
  %1597 = vmatpush1.bf16.msra.mxu0 %v1451
  %1598 = vmatprep.subr.bf16.mxu0 0
  %1599 = vmatpush1.bf16.msra.mxu0 %v1450
  %1600 = vmatprep.subr.bf16.mxu0 0
  %1601 = vmatpush1.bf16.msra.mxu0 %v1449
  %1602 = vmatprep.subr.bf16.mxu0 0
  %1603 = vmatpush1.bf16.msra.mxu0 %v1448
  %1604 = vmatprep.subr.bf16.mxu0 0
  %1605 = vmatpush1.bf16.msra.mxu0 %v1447
  %1606 = vmatprep.subr.bf16.mxu0 0
  %1607 = vmatpush1.bf16.msra.mxu0 %v1446
  %1608 = vmatprep.subr.bf16.mxu0 0
  %1609 = vmatpush1.bf16.msra.mxu0 %v1445
  %1610 = vmatprep.subr.bf16.mxu0 0
  %1611 = vmatpush1.bf16.msra.mxu0 %v1444
  %1612 = vmatprep.subr.bf16.mxu0 0
  %1613 = vmatpush2.bf16.msra.mxu0 %v1459
  %1614 = vmatprep.subr.bf16.mxu0 0
  %1615 = vmatpush2.bf16.msra.mxu0 %v1458
  %1616 = vmatprep.subr.bf16.mxu0 0
  %1617 = vmatpush2.bf16.msra.mxu0 %v1457
  %1618 = vmatprep.subr.bf16.mxu0 0
  %1619 = vmatpush2.bf16.msra.mxu0 %v1456
  %1620 = vmatprep.subr.bf16.mxu0 0
  %1621 = vmatpush2.bf16.msra.mxu0 %v1455
  %1622 = vmatprep.subr.bf16.mxu0 0
  %1623 = vmatpush2.bf16.msra.mxu0 %v1454
  %1624 = vmatprep.subr.bf16.mxu0 0
  %1625 = vmatpush2.bf16.msra.mxu0 %v1453
  %1626 = vmatprep.subr.bf16.mxu0 0
  %1627 = vmatpush2.bf16.msra.mxu0 %v1452
  %1628 = vmatprep.mubr.bf16.mxu0 %v1032
  %1629 = vmatmul.mubr.bf16.gmra.mxu0 %v1031
  %v1630 = vpop.f32.mrf.mxu0
  %v1631 = vadd.f32 %v1591, %v1630
  %v1632 = vpop.f32.mrf.mxu0
  %v1633 = vpop.f32.mrf.mxu0
  %v1634 = vpop.f32.mrf.mxu0
  %1635 = vdwg.mxu0
  %1636 = vmatprep.subr.bf16.mxu0 0
  %1637 = vmatpush1.bf16.msra.mxu0 %v1467
  %1638 = vmatprep.subr.bf16.mxu0 0
  %1639 = vmatpush1.bf16.msra.mxu0 %v1466
  %1640 = vmatprep.subr.bf16.mxu0 0
  %1641 = vmatpush1.bf16.msra.mxu0 %v1465
  %1642 = vmatprep.subr.bf16.mxu0 0
  %1643 = vmatpush1.bf16.msra.mxu0 %v1464
  %1644 = vmatprep.subr.bf16.mxu0 0
  %1645 = vmatpush1.bf16.msra.mxu0 %v1463
  %1646 = vmatprep.subr.bf16.mxu0 0
  %1647 = vmatpush1.bf16.msra.mxu0 %v1462
  %1648 = vmatprep.subr.bf16.mxu0 0
  %1649 = vmatpush1.bf16.msra.mxu0 %v1461
  %1650 = vmatprep.subr.bf16.mxu0 0
  %1651 = vmatpush1.bf16.msra.mxu0 %v1460
  %1652 = vmatprep.subr.bf16.mxu0 0
  %1653 = vmatpush2.bf16.msra.mxu0 %v1475
  %1654 = vmatprep.subr.bf16.mxu0 0
  %1655 = vmatpush2.bf16.msra.mxu0 %v1474
  %1656 = vmatprep.subr.bf16.mxu0 0
  %1657 = vmatpush2.bf16.msra.mxu0 %v1473
  %1658 = vmatprep.subr.bf16.mxu0 0
  %1659 = vmatpush2.bf16.msra.mxu0 %v1472
  %1660 = vmatprep.subr.bf16.mxu0 0
  %1661 = vmatpush2.bf16.msra.mxu0 %v1471
  %1662 = vmatprep.subr.bf16.mxu0 0
  %1663 = vmatpush2.bf16.msra.mxu0 %v1470
  %1664 = vmatprep.subr.bf16.mxu0 0
  %1665 = vmatpush2.bf16.msra.mxu0 %v1469
  %1666 = vmatprep.subr.bf16.mxu0 0
  %1667 = vmatpush2.bf16.msra.mxu0 %v1468
  %1668 = vmatprep.mubr.bf16.mxu0 %v1034
  %1669 = vmatmul.mubr.bf16.gmra.mxu0 %v1033
  %v1670 = vpop.f32.mrf.mxu0
  %v1671 = vadd.f32 %v1631, %v1670
  %v1672 = vpop.f32.mrf.mxu0
  %v1673 = vpop.f32.mrf.mxu0
  %v1674 = vpop.f32.mrf.mxu0
  %1675 = vdwg.mxu0
  %1676 = vmatprep.subr.bf16.mxu0 0
  %1677 = vmatpush1.bf16.msra.mxu0 %v1483
  %1678 = vmatprep.subr.bf16.mxu0 0
  %1679 = vmatpush1.bf16.msra.mxu0 %v1482
  %1680 = vmatprep.subr.bf16.mxu0 0
  %1681 = vmatpush1.bf16.msra.mxu0 %v1481
  %1682 = vmatprep.subr.bf16.mxu0 0
  %1683 = vmatpush1.bf16.msra.mxu0 %v1480
  %1684 = vmatprep.subr.bf16.mxu0 0
  %1685 = vmatpush1.bf16.msra.mxu0 %v1479
  %1686 = vmatprep.subr.bf16.mxu0 0
  %1687 = vmatpush1.bf16.msra.mxu0 %v1478
  %1688 = vmatprep.subr.bf16.mxu0 0
  %1689 = vmatpush1.bf16.msra.mxu0 %v1477
  %1690 = vmatprep.subr.bf16.mxu0 0
  %1691 = vmatpush1.bf16.msra.mxu0 %v1476
  %1692 = vmatprep.subr.bf16.mxu0 0
  %1693 = vmatpush2.bf16.msra.mxu0 %v1491
  %1694 = vmatprep.subr.bf16.mxu0 0
  %1695 = vmatpush2.bf16.msra.mxu0 %v1490
  %1696 = vmatprep.subr.bf16.mxu0 0
  %1697 = vmatpush2.bf16.msra.mxu0 %v1489
  %1698 = vmatprep.subr.bf16.mxu0 0
  %1699 = vmatpush2.bf16.msra.mxu0 %v1488
  %1700 = vmatprep.subr.bf16.mxu0 0
  %1701 = vmatpush2.bf16.msra.mxu0 %v1487
  %1702 = vmatprep.subr.bf16.mxu0 0
  %1703 = vmatpush2.bf16.msra.mxu0 %v1486
  %1704 = vmatprep.subr.bf16.mxu0 0
  %1705 = vmatpush2.bf16.msra.mxu0 %v1485
  %1706 = vmatprep.subr.bf16.mxu0 0
  %1707 = vmatpush2.bf16.msra.mxu0 %v1484
  %1708 = vmatprep.mubr.bf16.mxu0 %v1036
  %1709 = vmatmul.mubr.bf16.gmra.mxu0 %v1035
  %v1710 = vpop.f32.mrf.mxu0
  %v1711 = vadd.f32 %v1671, %v1710
  %v1712 = vpop.f32.mrf.mxu0
  %v1713 = vpop.f32.mrf.mxu0
  %v1714 = vpop.f32.mrf.mxu0
  %1715 = vdwg.mxu0
  %1716 = vst [vmem:[%s5] sm:$0x3] %v1711
  // Predicated region
  $region22: #{dueling_dqn_forward.8} parent=0 // pred_check
    _
  $region23: #{dueling_dqn_forward.8} parent=0 // pred_check_branch
    %1718 = sbr.rel (0) target = $region25
  $region24: #{dueling_dqn_forward.8} parent=0 // pred_region
    _
  $region25: #{dueling_dqn_forward.8} parent=0 // pred_fallthru
    _
  // Predicated region
  $region26: #{dueling_dqn_forward.8} parent=0 // pred_check
    _
  $region27: #{dueling_dqn_forward.8} parent=0 // pred_check_branch
    %1720 = sbr.rel (0) target = $region29
  $region28: #{dueling_dqn_forward.8} parent=0 // pred_region
    _
  $region29: #{dueling_dqn_forward.8} parent=0 // pred_fallthru
    _

</llo_original>
